<compile_context>
chip_gen: v6e
topology: v6e:2x2x1
jax: 0.10.0
libtpu: 0.0.40
codegen_flags: <defaults>
</compile_context>

<pallas_src>
import math

import jax
import jax.numpy as jnp
import numpy as np
from jax.experimental import pallas as pl
from jax.experimental.pallas import tpu as pltpu

LANE_PAD = 128   # pad dim_latent / shape_output feature dims to a full lane width
LN_EPS = 1e-5    # PyTorch nn.LayerNorm default


# ----------------------------- Pallas kernel ---------------------------------
def cls_fused_kernel(x_ref, pool_ref, w1_ref, b1_ref, w2_ref, b2_ref,
                     w3_ref, b3_ref, o_ref):
    """Fused AdaptiveAvgPool3d -> LayerNorm -> (Linear+ReLU) x2 -> Linear.

    x_ref    : (TILE_N, C*D*H*W) raw activations (backbone == identity)
    pool_ref : (C*D*H*W, dim_state) constant averaging matrix (pool on the MXU)
    w1_ref   : LayerNorm affine already folded in (w1' = diag(gamma) @ w1,
               b1' = b1 + beta @ w1), so only the normalization remains here.
    """
    # AdaptiveAvgPool3d (+ flatten) as one MXU matmul against the constant matrix.
    p = jnp.dot(x_ref[...], pool_ref[...], preferred_element_type=jnp.float32)

    # LayerNorm statistics in a single pass: var = E[x^2] - mu^2.
    # Padded all-zero batch rows give var == 0; eps keeps rsqrt finite and
    # (p - mu) == 0, so nothing non-finite reaches the store -- do NOT drop eps.
    mu = jnp.mean(p, axis=-1, keepdims=True)
    ms = jnp.mean(p * p, axis=-1, keepdims=True)
    xn = (p - mu) * jax.lax.rsqrt(ms - mu * mu + LN_EPS)

    # lin1 + ReLU   (dropout is identity at inference)
    h1 = jnp.maximum(
        jnp.dot(xn, w1_ref[...], preferred_element_type=jnp.float32) + b1_ref[...], 0.0)
    # lin2 + ReLU
    h2 = jnp.maximum(
        jnp.dot(h1, w2_ref[...], preferred_element_type=jnp.float32) + b2_ref[...], 0.0)
    # lin3  (lane-dense 128-wide padded output; wrapper slices the real columns)
    o_ref[...] = jnp.dot(h2, w3_ref[...], preferred_element_type=jnp.float32) + b3_ref[...]


# ------------------------------ helpers ---------------------------------------
def _round_up(a, b):
    return (a + b - 1) // b * b


def _build_pool_matrix(C, D, H, W, avg_pool_shape, dtype=jnp.float32):
    """Constant (C*D*H*W, C*od*oh*ow) averaging matrix so AdaptiveAvgPool3d
    (divisible case) + flatten becomes a single MXU matmul inside the kernel.
    Column order matches PyTorch's `.contiguous().view(N, -1)` of (C, od, oh, ow)."""
    od, oh, ow = avg_pool_shape
    kd, kh, kw = D // od, H // oh, W // ow
    c, d, h, w = np.meshgrid(np.arange(C), np.arange(D), np.arange(H), np.arange(W),
                             indexing="ij")
    rows = (((c * D + d) * H + h) * W + w).ravel()
    cols = (((c * od + d // kd) * oh + h // kh) * ow + w // kw).ravel()
    mat = np.zeros((C * D * H * W, C * od * oh * ow), np.float32)
    mat[rows, cols] = 1.0 / (kd * kh * kw)
    return jnp.asarray(mat, dtype)


def _choose_tile_n(n, in_features, out_features, resident_bytes,
                   vmem_budget=24 * 1024 * 1024, cap=2048):
    """Pick the batch tile: large enough to amortize the ~0.35us/step pipeline
    overhead, small enough that the double-buffered in/out blocks plus resident
    weights stay under a 32 MiB scoped-VMEM limit on every generation (v7x has
    only 64 MiB physical / 32 MiB default scoped).  Also prefer >=2 grid steps so
    the "parallel" batch axis can shard across v7x's two TensorCores."""
    n8 = _round_up(max(n, 1), 8)
    per_row = 2 * 4 * (in_features + out_features)      # dbl-buffered f32 in + out
    fit = max(8, ((vmem_budget - resident_bytes) // per_row) // 8 * 8)
    tile = min(cap, fit, n8)
    steps = pl.cdiv(n8, tile)
    if steps < 2 and n8 >= 16:
        steps = 2                                        # v7x: 2 TCs want >=2 steps
    tile = _round_up(pl.cdiv(n8, steps), 8)              # rebalance: no tiny last tile
    n_pad = _round_up(n8, tile)
    return tile, n_pad


# ------------------------------- wrapper --------------------------------------
def cls_forward(x, params, shape_output, avg_pool_shape=(1, 6, 6)):
    """x: (N, C, D, H, W) float32.  Returns (N, shape_output) float32."""
    N, C, D, H, W = x.shape
    od, oh, ow = avg_pool_shape
    assert D % od == 0 and H % oh == 0 and W % ow == 0, "use divisible spatial dims"

    gamma, beta, w1, b1, w2, b2, w3, b3 = params
    # Fold the LayerNorm affine into lin1 (exact reassociation): drops two full
    # VPU passes over the normalized tile per grid step.
    w1f = w1 * gamma.reshape(-1, 1)
    b1f = b1 + beta @ w1

    pool_mat = _build_pool_matrix(C, D, H, W, avg_pool_shape)
    in_features = C * D * H * W
    dim_state = pool_mat.shape[1]
    p_lat = w1.shape[1]
    p_out = w3.shape[1]          # padded logits width (bugfix: derive from w3, not w1)

    x_flat = x.reshape(N, in_features)   # contiguous; matches PyTorch memory order

    resident_bytes = 2 * 4 * int(pool_mat.size + w1f.size + w2.size + w3.size
                                 + b1f.size + b2.size + b3.size)
    tile_n, n_pad = _choose_tile_n(N, in_features, p_out, resident_bytes)
    if n_pad != N:
        # TODO(synk): masking the last tile's store would avoid this HBM copy for ragged N.
        x_flat = jnp.pad(x_flat, ((0, n_pad - N), (0, 0)))

    const = lambda i: (0, 0)   # weights / pool matrix stay VMEM-resident across steps
    out = pl.pallas_call(
        cls_fused_kernel,
        out_shape=jax.ShapeDtypeStruct((n_pad, p_out), jnp.float32),
        grid_spec=pltpu.PrefetchScalarGridSpec(
            num_scalar_prefetch=0,
            grid=(n_pad // tile_n,),
            in_specs=[
                pl.BlockSpec((tile_n, in_features), lambda i: (i, 0)),  # raw x
                pl.BlockSpec((in_features, dim_state), const),          # pool matrix
                pl.BlockSpec((dim_state, p_lat), const),                # w1 (LN folded)
                pl.BlockSpec((1, p_lat), const),                        # b1 (LN folded)
                pl.BlockSpec((p_lat, p_lat), const),                    # w2
                pl.BlockSpec((1, p_lat), const),                        # b2
                pl.BlockSpec((p_lat, p_out), const),                    # w3
                pl.BlockSpec((1, p_out), const),                        # b3
            ],
            out_specs=pl.BlockSpec((tile_n, p_out), lambda i: (i, 0)),
        ),
        compiler_params=pltpu.CompilerParams(
            dimension_semantics=("parallel",),      # batch axis shards across v7x TCs
            vmem_limit_bytes=32 * 1024 * 1024,      # > v5e's 16 MiB scoped default
        ),
    )(x_flat, pool_mat, w1f, b1f, w2, b2, w3, b3)

    return out[:N, :shape_output]


# --------------------------- deterministic params -----------------------------
def xavier_uniform(key, fan_in, fan_out):
    limit = math.sqrt(6.0 / (fan_in + fan_out))
    # stored (in, out) so the kernel does x @ W  (== PyTorch x @ W_pt.T)
    return jax.random.uniform(key, (fan_in, fan_out), jnp.float32, -limit, limit)


def _pad_cols(w, p):
    return jnp.pad(w, ((0, 0), (0, p - w.shape[1])))


def _pad_rows_cols(w, pr, pc):
    return jnp.pad(w, ((0, pr - w.shape[0]), (0, pc - w.shape[1])))


def init_params(key, dim_state, dim_latent, shape_output, pad=LANE_PAD):
    """Params with hidden/output feature dims zero-padded to `pad` (=128) lanes.

    Zero pad columns stay exactly zero through bias-add and ReLU, and padded rows
    of the following weight only ever multiply those zeros, so results are unchanged.
    (Per review: do NOT pad wider than 128 -- the kernel is DMA-bound, not MXU-bound.)
    """
    k1, k2, k3 = jax.random.split(key, 3)
    gamma = jnp.ones((1, dim_state), jnp.float32)    # LayerNorm weight (PyTorch default)
    beta = jnp.zeros((1, dim_state), jnp.float32)    # LayerNorm bias
    dl_p = max(pad, dim_latent)
    so_p = max(pad, shape_output)

    w1 = _pad_cols(xavier_uniform(k1, dim_state, dim_latent), dl_p)
    b1 = jnp.zeros((1, dl_p), jnp.float32)
    w2 = _pad_rows_cols(xavier_uniform(k2, dim_latent, dim_latent), dl_p, dl_p)
    b2 = jnp.zeros((1, dl_p), jnp.float32)
    w3 = _pad_rows_cols(xavier_uniform(k3, dim_latent, shape_output), dl_p, so_p)
    b3 = jnp.zeros((1, so_p), jnp.float32)
    return (gamma, beta, w1, b1, w2, b2, w3, b3)


# ------------------------------ pure-JAX reference -----------------------------
def cls_ref(x, params, shape_output, avg_pool_shape=(1, 6, 6)):
    N, C, D, H, W = x.shape
    od, oh, ow = avg_pool_shape
    kd, kh, kw = D // od, H // oh, W // ow
    pooled = x.reshape(N, C, od, kd, oh, kh, ow, kw).mean(axis=(3, 5, 7)).reshape(N, -1)
    gamma, beta, w1, b1, w2, b2, w3, b3 = params
    mu = pooled.mean(-1, keepdims=True)
    var = ((pooled - mu) ** 2).mean(-1, keepdims=True)
    xn = (pooled - mu) * jax.lax.rsqrt(var + LN_EPS) * gamma + beta
    h1 = jnp.maximum(xn @ w1 + b1, 0.0)
    h2 = jnp.maximum(h1 @ w2 + b2, 0.0)
    return (h2 @ w3 + b3)[:, :shape_output]


if __name__ == "__main__":
    # Shapes consistent with the module:
    #   shape_input = (C, D, H, W) = (4, 4, 12, 12), avg_pool_shape = (1, 6, 6)
    #   dim_state   = 4 * 1 * 6 * 6 = 144, dim_latent = 32, shape_output = 10
    N, C, D, H, W = 2, 4, 4, 12, 12
    dim_latent, shape_output = 32, 10
    avg_pool_shape = (1, 6, 6)
    dim_state = C * math.prod(avg_pool_shape)

    key = jax.random.PRNGKey(0)
    kx, kp = jax.random.split(key)
    x = jax.random.normal(kx, (N, C, D, H, W), jnp.float32)
    params = init_params(kp, dim_state, dim_latent, shape_output)

    out = cls_forward(x, params, shape_output, avg_pool_shape)
    jax.block_until_ready(out)
    assert out.shape == (N, shape_output)

    ref = cls_ref(x, params, shape_output, avg_pool_shape)
    np.testing.assert_allclose(np.asarray(out), np.asarray(ref), rtol=5e-4, atol=5e-4)
    print("KERNEL_OK")
</pallas_src>

<mosaic_0001>
module attributes {stable_mosaic.version = 11 : i64} {
  func.func @cls_fused_kernel(%arg0: i32, %arg1: memref<8x2304xf32, #tpu.memory_space<vmem>>, %arg2: memref<2304x144xf32, #tpu.memory_space<vmem>>, %arg3: memref<144x128xf32, #tpu.memory_space<vmem>>, %arg4: memref<1x128xf32, #tpu.memory_space<vmem>>, %arg5: memref<128x128xf32, #tpu.memory_space<vmem>>, %arg6: memref<1x128xf32, #tpu.memory_space<vmem>>, %arg7: memref<128x128xf32, #tpu.memory_space<vmem>>, %arg8: memref<1x128xf32, #tpu.memory_space<vmem>>, %arg9: memref<8x128xf32, #tpu.memory_space<vmem>>) attributes {dimension_semantics = [#tpu.dimension_semantics<parallel>], iteration_bounds = array<i64: 1>, scalar_prefetch = 0 : i64, scratch_operands = 0 : i64, tpu.core_type = #tpu.core_type<tc>, window_params = [{transform_indices = @transform_0, window_bounds = array<i64: 8, 2304>}, {pipeline_mode = #tpu.pipeline_mode<synchronous>, transform_indices = @transform_1, window_bounds = array<i64: 2304, 144>}, {pipeline_mode = #tpu.pipeline_mode<synchronous>, transform_indices = @transform_2, window_bounds = array<i64: 144, 128>}, {pipeline_mode = #tpu.pipeline_mode<synchronous>, transform_indices = @transform_3, window_bounds = array<i64: 1, 128>}, {pipeline_mode = #tpu.pipeline_mode<synchronous>, transform_indices = @transform_4, window_bounds = array<i64: 128, 128>}, {pipeline_mode = #tpu.pipeline_mode<synchronous>, transform_indices = @transform_5, window_bounds = array<i64: 1, 128>}, {pipeline_mode = #tpu.pipeline_mode<synchronous>, transform_indices = @transform_6, window_bounds = array<i64: 128, 128>}, {pipeline_mode = #tpu.pipeline_mode<synchronous>, transform_indices = @transform_7, window_bounds = array<i64: 1, 128>}, {transform_indices = @transform_8, window_bounds = array<i64: 8, 128>}]} {
    %c0 = arith.constant 0 : index
    %c0_0 = arith.constant 0 : index
    %0 = vector.load %arg1[%c0, %c0_0] : memref<8x2304xf32, #tpu.memory_space<vmem>>, vector<8x2304xf32>
    %c0_1 = arith.constant 0 : index
    %c0_2 = arith.constant 0 : index
    %1 = vector.load %arg2[%c0_1, %c0_2] : memref<2304x144xf32, #tpu.memory_space<vmem>>, vector<2304x144xf32>
    %cst = arith.constant dense<0.000000e+00> : vector<8x144xf32>
    %2 = tpu.matmul %0, %1, %cst {dimension_numbers = #tpu.dot_dimension_numbers<[1], [0], [0], [1], [0, 0, 1, 1], [], []>} : vector<8x2304xf32>, vector<2304x144xf32>, vector<8x144xf32> -> vector<8x144xf32>
    %cst_3 = arith.constant dense<0.000000e+00> : vector<8xf32>
    %3 = vector.multi_reduction <add>, %2, %cst_3 [1] : vector<8x144xf32> to vector<8xf32>
    %4 = vector.shape_cast %3 : vector<8xf32> to vector<8x1xf32>
    %cst_4 = arith.constant 1.440000e+02 : f32
    %5 = vector.broadcast %cst_4 : f32 to vector<8x1xf32>
    %6 = arith.divf %4, %5 : vector<8x1xf32>
    %7 = arith.mulf %2, %2 : vector<8x144xf32>
    %cst_5 = arith.constant dense<0.000000e+00> : vector<8xf32>
    %8 = vector.multi_reduction <add>, %7, %cst_5 [1] : vector<8x144xf32> to vector<8xf32>
    %9 = vector.shape_cast %8 : vector<8xf32> to vector<8x1xf32>
    %cst_6 = arith.constant 1.440000e+02 : f32
    %10 = vector.broadcast %cst_6 : f32 to vector<8x1xf32>
    %11 = arith.divf %9, %10 : vector<8x1xf32>
    %12 = vector.broadcast %6 : vector<8x1xf32> to vector<8x144xf32>
    %13 = arith.subf %2, %12 : vector<8x144xf32>
    %14 = arith.mulf %6, %6 : vector<8x1xf32>
    %15 = arith.subf %11, %14 : vector<8x1xf32>
    %cst_7 = arith.constant 9.99999974E-6 : f32
    %16 = vector.broadcast %cst_7 : f32 to vector<8x1xf32>
    %17 = arith.addf %15, %16 : vector<8x1xf32>
    %18 = math.rsqrt %17 : vector<8x1xf32>
    %19 = vector.broadcast %18 : vector<8x1xf32> to vector<8x144xf32>
    %20 = arith.mulf %13, %19 : vector<8x144xf32>
    %c0_8 = arith.constant 0 : index
    %c0_9 = arith.constant 0 : index
    %21 = vector.load %arg3[%c0_8, %c0_9] : memref<144x128xf32, #tpu.memory_space<vmem>>, vector<144x128xf32>
    %cst_10 = arith.constant dense<0.000000e+00> : vector<8x128xf32>
    %22 = tpu.matmul %20, %21, %cst_10 {dimension_numbers = #tpu.dot_dimension_numbers<[1], [0], [0], [1], [0, 0, 1, 1], [], []>} : vector<8x144xf32>, vector<144x128xf32>, vector<8x128xf32> -> vector<8x128xf32>
    %c0_11 = arith.constant 0 : index
    %c0_12 = arith.constant 0 : index
    %23 = vector.load %arg4[%c0_11, %c0_12] : memref<1x128xf32, #tpu.memory_space<vmem>>, vector<1x128xf32>
    %24 = vector.broadcast %23 : vector<1x128xf32> to vector<8x128xf32>
    %25 = arith.addf %22, %24 : vector<8x128xf32>
    %cst_13 = arith.constant 0.000000e+00 : f32
    %26 = vector.broadcast %cst_13 : f32 to vector<8x128xf32>
    %27 = arith.maximumf %25, %26 : vector<8x128xf32>
    %c0_14 = arith.constant 0 : index
    %c0_15 = arith.constant 0 : index
    %28 = vector.load %arg5[%c0_14, %c0_15] : memref<128x128xf32, #tpu.memory_space<vmem>>, vector<128x128xf32>
    %cst_16 = arith.constant dense<0.000000e+00> : vector<8x128xf32>
    %29 = tpu.matmul %27, %28, %cst_16 {dimension_numbers = #tpu.dot_dimension_numbers<[1], [0], [0], [1], [0, 0, 1, 1], [], []>} : vector<8x128xf32>, vector<128x128xf32>, vector<8x128xf32> -> vector<8x128xf32>
    %c0_17 = arith.constant 0 : index
    %c0_18 = arith.constant 0 : index
    %30 = vector.load %arg6[%c0_17, %c0_18] : memref<1x128xf32, #tpu.memory_space<vmem>>, vector<1x128xf32>
    %31 = vector.broadcast %30 : vector<1x128xf32> to vector<8x128xf32>
    %32 = arith.addf %29, %31 : vector<8x128xf32>
    %cst_19 = arith.constant 0.000000e+00 : f32
    %33 = vector.broadcast %cst_19 : f32 to vector<8x128xf32>
    %34 = arith.maximumf %32, %33 : vector<8x128xf32>
    %c0_20 = arith.constant 0 : index
    %c0_21 = arith.constant 0 : index
    %35 = vector.load %arg7[%c0_20, %c0_21] : memref<128x128xf32, #tpu.memory_space<vmem>>, vector<128x128xf32>
    %cst_22 = arith.constant dense<0.000000e+00> : vector<8x128xf32>
    %36 = tpu.matmul %34, %35, %cst_22 {dimension_numbers = #tpu.dot_dimension_numbers<[1], [0], [0], [1], [0, 0, 1, 1], [], []>} : vector<8x128xf32>, vector<128x128xf32>, vector<8x128xf32> -> vector<8x128xf32>
    %c0_23 = arith.constant 0 : index
    %c0_24 = arith.constant 0 : index
    %37 = vector.load %arg8[%c0_23, %c0_24] : memref<1x128xf32, #tpu.memory_space<vmem>>, vector<1x128xf32>
    %38 = vector.broadcast %37 : vector<1x128xf32> to vector<8x128xf32>
    %39 = arith.addf %36, %38 : vector<8x128xf32>
    %c0_25 = arith.constant 0 : index
    %c0_26 = arith.constant 0 : index
    %40 = vector.load %arg9[%c0_25, %c0_26] : memref<8x128xf32, #tpu.memory_space<vmem>>, vector<8x128xf32>
    tpu.vector_store %arg9[%c0_25, %c0_26], %39 {strides = array<i32>} : memref<8x128xf32, #tpu.memory_space<vmem>>, vector<8x128xf32>,
    return
  }
  func.func @transform_0(%arg0: i32) -> (i32, i32) {
    %c0_i32 = arith.constant 0 : i32
    %c0_i32_0 = arith.constant 0 : i32
    return %arg0, %c0_i32 : i32, i32
  }
  func.func @transform_1(%arg0: i32) -> (i32, i32) {
    %c0_i32 = arith.constant 0 : i32
    %c0_i32_0 = arith.constant 0 : i32
    %c0_i32_1 = arith.constant 0 : i32
    return %c0_i32, %c0_i32_0 : i32, i32
  }
  func.func @transform_2(%arg0: i32) -> (i32, i32) {
    %c0_i32 = arith.constant 0 : i32
    %c0_i32_0 = arith.constant 0 : i32
    %c0_i32_1 = arith.constant 0 : i32
    return %c0_i32, %c0_i32_0 : i32, i32
  }
  func.func @transform_3(%arg0: i32) -> (i32, i32) {
    %c0_i32 = arith.constant 0 : i32
    %c0_i32_0 = arith.constant 0 : i32
    %c0_i32_1 = arith.constant 0 : i32
    return %c0_i32, %c0_i32_0 : i32, i32
  }
  func.func @transform_4(%arg0: i32) -> (i32, i32) {
    %c0_i32 = arith.constant 0 : i32
    %c0_i32_0 = arith.constant 0 : i32
    %c0_i32_1 = arith.constant 0 : i32
    return %c0_i32, %c0_i32_0 : i32, i32
  }
  func.func @transform_5(%arg0: i32) -> (i32, i32) {
    %c0_i32 = arith.constant 0 : i32
    %c0_i32_0 = arith.constant 0 : i32
    %c0_i32_1 = arith.constant 0 : i32
    return %c0_i32, %c0_i32_0 : i32, i32
  }
  func.func @transform_6(%arg0: i32) -> (i32, i32) {
    %c0_i32 = arith.constant 0 : i32
    %c0_i32_0 = arith.constant 0 : i32
    %c0_i32_1 = arith.constant 0 : i32
    return %c0_i32, %c0_i32_0 : i32, i32
  }
  func.func @transform_7(%arg0: i32) -> (i32, i32) {
    %c0_i32 = arith.constant 0 : i32
    %c0_i32_0 = arith.constant 0 : i32
    %c0_i32_1 = arith.constant 0 : i32
    return %c0_i32, %c0_i32_0 : i32, i32
  }
  func.func @transform_8(%arg0: i32) -> (i32, i32) {
    %c0_i32 = arith.constant 0 : i32
    %c0_i32_0 = arith.constant 0 : i32
    return %arg0, %c0_i32 : i32, i32
  }
}

</mosaic_0001>

<llo_original>
// kernel: tpu_custom_call.1
$region0: #{tpu_custom_call.1}
  #allocation0 [shape = 'u32[]', space=smem, size = 0x4, offset = 0x4, fixed_abs, tag = 'smem constant byte address 0x4 - core index']
  #allocation1 [shape = 'u32[144,128]{1,0:T(1,128)}', space=vmem, size = 0x12000, scoped, tag = 'internal scratch']
  %s0 = inlined_call_operand.vmem [shape: f32[8,2304], index: 0, kind: input, shape index: {}]
  %s1 = inlined_call_operand.vmem [shape: f32[2304,144], index: 1, kind: input, shape index: {}]
  %s2 = inlined_call_operand.vmem [shape: f32[144,128], index: 2, kind: input, shape index: {}]
  %s3 = inlined_call_operand.vmem [shape: f32[1,128], index: 3, kind: input, shape index: {}]
  %s4 = inlined_call_operand.vmem [shape: f32[128,128], index: 4, kind: input, shape index: {}]
  %s5 = inlined_call_operand.vmem [shape: f32[1,128], index: 5, kind: input, shape index: {}]
  %s6 = inlined_call_operand.vmem [shape: f32[128,128], index: 6, kind: input, shape index: {}]
  %s7 = inlined_call_operand.vmem [shape: f32[1,128], index: 7, kind: input, shape index: {}]
  %s8 = inlined_call_operand.hbm [shape: f32[8,128], index: 8, kind: output, shape index: {}]
  %s9 = sld [smem:[#allocation0]]
  $region42: #{tpu_custom_call.1} parent=0
    _
  %s11 = ssub.s32 1, %s9
  %s12 = scalar_select 0, %s11, %s9
  $region1: #{tpu_custom_call.1} parent=0
    #allocation2 [shape = 'u8[4096]{0}', space=vmem, size = 0x1000, scoped, tag = 'output window, operand 0, single buffered']
    #allocation3 [shape = 's32[1]{0}', space=sflag, size = 0x4, scoped, tag = 'scoped memory for tpu_custom_call.1']
    %13 = vsyncpa [#allocation3], 0
    // Predicated region
    $region2: #{tpu_custom_call.1} parent=1 // pred_check
      _
    $region3: #{tpu_custom_call.1} parent=1 // pred_check_branch
      %15 = sbr.rel (0) target = $region5
    $region4: #{tpu_custom_call.1} parent=1 // pred_region
      _
    $region5: #{tpu_custom_call.1} parent=1 // pred_fallthru
      _
    // Predicated region
    $region6: #{tpu_custom_call.1} parent=1 // pred_check
      _
    $region7: #{tpu_custom_call.1} parent=1 // pred_check_branch
      %17 = sbr.rel (0) target = $region9
    $region8: #{tpu_custom_call.1} parent=1 // pred_region
      _
    $region9: #{tpu_custom_call.1} parent=1 // pred_fallthru
      _
    // Predicated region
    $region10: #{tpu_custom_call.1} parent=1 // pred_check
      _
    $region11: #{tpu_custom_call.1} parent=1 // pred_check_branch
      %19 = sbr.rel (0) target = $region13
    $region12: #{tpu_custom_call.1} parent=1 // pred_region
      _
    $region13: #{tpu_custom_call.1} parent=1 // pred_fallthru
      _
    // Predicated region
    $region14: #{tpu_custom_call.1} parent=1 // pred_check
      _
    $region15: #{tpu_custom_call.1} parent=1 // pred_check_branch
      %21 = sbr.rel (0) target = $region17
    $region16: #{tpu_custom_call.1} parent=1 // pred_region
      _
    $region17: #{tpu_custom_call.1} parent=1 // pred_fallthru
      _
    // Predicated region
    $region18: #{tpu_custom_call.1} parent=1 // pred_check
      _
    $region19: #{tpu_custom_call.1} parent=1 // pred_check_branch
      %23 = sbr.rel (0) target = $region21
    $region20: #{tpu_custom_call.1} parent=1 // pred_region
      _
    $region21: #{tpu_custom_call.1} parent=1 // pred_fallthru
      _
    // Predicated region
    $region22: #{tpu_custom_call.1} parent=1 // pred_check
      _
    $region23: #{tpu_custom_call.1} parent=1 // pred_check_branch
      %25 = sbr.rel (0) target = $region25
    $region24: #{tpu_custom_call.1} parent=1 // pred_region
      _
    $region25: #{tpu_custom_call.1} parent=1 // pred_fallthru
      _
    // Predicated region
    $region26: #{tpu_custom_call.1} parent=1 // pred_check
      _
    $region27: #{tpu_custom_call.1} parent=1 // pred_check_branch
      %27 = sbr.rel (0) target = $region29
    $region28: #{tpu_custom_call.1} parent=1 // pred_region
      _
    $region29: #{tpu_custom_call.1} parent=1 // pred_fallthru
      _
    // Predicated region
    $region30: #{tpu_custom_call.1} parent=1 // pred_check
      _
    $region31: #{tpu_custom_call.1} parent=1 // pred_check_branch
      %29 = sbr.rel (0) target = $region33
    $region32: #{tpu_custom_call.1} parent=1 // pred_region
      _
    $region33: #{tpu_custom_call.1} parent=1 // pred_fallthru
      _
    %v30 = vld [vmem:[%s0] sm:$0xff]
    %v31 = vld [vmem:[%s0 + $0x8] sm:$0xff]
    %v32 = vld [vmem:[%s0 + $0x10] sm:$0xff]
    %v33 = vld [vmem:[%s0 + $0x18] sm:$0xff]
    %v34 = vld [vmem:[%s0 + $0x20] sm:$0xff]
    %v35 = vld [vmem:[%s0 + $0x28] sm:$0xff]
    %v36 = vld [vmem:[%s0 + $0x30] sm:$0xff]
    %v37 = vld [vmem:[%s0 + $0x38] sm:$0xff]
    %v38 = vld [vmem:[%s0 + $0x40] sm:$0xff]
    %v39 = vld [vmem:[%s0 + $0x48] sm:$0xff]
    %v40 = vld [vmem:[%s0 + $0x50] sm:$0xff]
    %v41 = vld [vmem:[%s0 + $0x58] sm:$0xff]
    %v42 = vld [vmem:[%s0 + $0x60] sm:$0xff]
    %v43 = vld [vmem:[%s0 + $0x68] sm:$0xff]
    %v44 = vld [vmem:[%s0 + $0x70] sm:$0xff]
    %v45 = vld [vmem:[%s0 + $0x78] sm:$0xff]
    %v46 = vld [vmem:[%s0 + $0x80] sm:$0xff]
    %v47 = vld [vmem:[%s0 + $0x88] sm:$0xff]
    %v48 = vld [vmem:[%s1] sm:$0xff]
    %v49 = vld [vmem:[%s1 + $0x8] sm:$0xff]
    %v50 = vld [vmem:[%s1 + $0x10] sm:$0xff]
    %v51 = vld [vmem:[%s1 + $0x18] sm:$0xff]
    %v52 = vld [vmem:[%s1 + $0x20] sm:$0xff]
    %v53 = vld [vmem:[%s1 + $0x28] sm:$0xff]
    %v54 = vld [vmem:[%s1 + $0x30] sm:$0xff]
    %v55 = vld [vmem:[%s1 + $0x38] sm:$0xff]
    %v56 = vld [vmem:[%s1 + $0x40] sm:$0xff]
    %v57 = vld [vmem:[%s1 + $0x48] sm:$0xff]
    %v58 = vld [vmem:[%s1 + $0x50] sm:$0xff]
    %v59 = vld [vmem:[%s1 + $0x58] sm:$0xff]
    %v60 = vld [vmem:[%s1 + $0x60] sm:$0xff]
    %v61 = vld [vmem:[%s1 + $0x68] sm:$0xff]
    %v62 = vld [vmem:[%s1 + $0x70] sm:$0xff]
    %v63 = vld [vmem:[%s1 + $0x78] sm:$0xff]
    %v64 = vld [vmem:[%s1 + $0x80] sm:$0xff]
    %v65 = vld [vmem:[%s1 + $0x88] sm:$0xff]
    %v66 = vld [vmem:[%s1 + $0x90] sm:$0xff]
    %v67 = vld [vmem:[%s1 + $0x98] sm:$0xff]
    %v68 = vld [vmem:[%s1 + $0xa0] sm:$0xff]
    %v69 = vld [vmem:[%s1 + $0xa8] sm:$0xff]
    %v70 = vld [vmem:[%s1 + $0xb0] sm:$0xff]
    %v71 = vld [vmem:[%s1 + $0xb8] sm:$0xff]
    %v72 = vld [vmem:[%s1 + $0xc0] sm:$0xff]
    %v73 = vld [vmem:[%s1 + $0xc8] sm:$0xff]
    %v74 = vld [vmem:[%s1 + $0xd0] sm:$0xff]
    %v75 = vld [vmem:[%s1 + $0xd8] sm:$0xff]
    %v76 = vld [vmem:[%s1 + $0xe0] sm:$0xff]
    %v77 = vld [vmem:[%s1 + $0xe8] sm:$0xff]
    %v78 = vld [vmem:[%s1 + $0xf0] sm:$0xff]
    %v79 = vld [vmem:[%s1 + $0xf8] sm:$0xff]
    %v80 = vld [vmem:[%s1 + $0x100] sm:$0xff]
    %v81 = vld [vmem:[%s1 + $0x108] sm:$0xff]
    %v82 = vld [vmem:[%s1 + $0x110] sm:$0xff]
    %v83 = vld [vmem:[%s1 + $0x118] sm:$0xff]
    %v84 = vld [vmem:[%s1 + $0x120] sm:$0xff]
    %v85 = vld [vmem:[%s1 + $0x128] sm:$0xff]
    %v86 = vld [vmem:[%s1 + $0x130] sm:$0xff]
    %v87 = vld [vmem:[%s1 + $0x138] sm:$0xff]
    %v88 = vld [vmem:[%s1 + $0x140] sm:$0xff]
    %v89 = vld [vmem:[%s1 + $0x148] sm:$0xff]
    %v90 = vld [vmem:[%s1 + $0x150] sm:$0xff]
    %v91 = vld [vmem:[%s1 + $0x158] sm:$0xff]
    %v92 = vld [vmem:[%s1 + $0x160] sm:$0xff]
    %v93 = vld [vmem:[%s1 + $0x168] sm:$0xff]
    %v94 = vld [vmem:[%s1 + $0x170] sm:$0xff]
    %v95 = vld [vmem:[%s1 + $0x178] sm:$0xff]
    %v96 = vld [vmem:[%s1 + $0x180] sm:$0xff]
    %v97 = vld [vmem:[%s1 + $0x188] sm:$0xff]
    %v98 = vld [vmem:[%s1 + $0x190] sm:$0xff]
    %v99 = vld [vmem:[%s1 + $0x198] sm:$0xff]
    %v100 = vld [vmem:[%s1 + $0x1a0] sm:$0xff]
    %v101 = vld [vmem:[%s1 + $0x1a8] sm:$0xff]
    %v102 = vld [vmem:[%s1 + $0x1b0] sm:$0xff]
    %v103 = vld [vmem:[%s1 + $0x1b8] sm:$0xff]
    %v104 = vld [vmem:[%s1 + $0x1c0] sm:$0xff]
    %v105 = vld [vmem:[%s1 + $0x1c8] sm:$0xff]
    %v106 = vld [vmem:[%s1 + $0x1d0] sm:$0xff]
    %v107 = vld [vmem:[%s1 + $0x1d8] sm:$0xff]
    %v108 = vld [vmem:[%s1 + $0x1e0] sm:$0xff]
    %v109 = vld [vmem:[%s1 + $0x1e8] sm:$0xff]
    %v110 = vld [vmem:[%s1 + $0x1f0] sm:$0xff]
    %v111 = vld [vmem:[%s1 + $0x1f8] sm:$0xff]
    %v112 = vld [vmem:[%s1 + $0x200] sm:$0xff]
    %v113 = vld [vmem:[%s1 + $0x208] sm:$0xff]
    %v114 = vld [vmem:[%s1 + $0x210] sm:$0xff]
    %v115 = vld [vmem:[%s1 + $0x218] sm:$0xff]
    %v116 = vld [vmem:[%s1 + $0x220] sm:$0xff]
    %v117 = vld [vmem:[%s1 + $0x228] sm:$0xff]
    %v118 = vld [vmem:[%s1 + $0x230] sm:$0xff]
    %v119 = vld [vmem:[%s1 + $0x238] sm:$0xff]
    %v120 = vld [vmem:[%s1 + $0x240] sm:$0xff]
    %v121 = vld [vmem:[%s1 + $0x248] sm:$0xff]
    %v122 = vld [vmem:[%s1 + $0x250] sm:$0xff]
    %v123 = vld [vmem:[%s1 + $0x258] sm:$0xff]
    %v124 = vld [vmem:[%s1 + $0x260] sm:$0xff]
    %v125 = vld [vmem:[%s1 + $0x268] sm:$0xff]
    %v126 = vld [vmem:[%s1 + $0x270] sm:$0xff]
    %v127 = vld [vmem:[%s1 + $0x278] sm:$0xff]
    %v128 = vld [vmem:[%s1 + $0x280] sm:$0xff]
    %v129 = vld [vmem:[%s1 + $0x288] sm:$0xff]
    %v130 = vld [vmem:[%s1 + $0x290] sm:$0xff]
    %v131 = vld [vmem:[%s1 + $0x298] sm:$0xff]
    %v132 = vld [vmem:[%s1 + $0x2a0] sm:$0xff]
    %v133 = vld [vmem:[%s1 + $0x2a8] sm:$0xff]
    %v134 = vld [vmem:[%s1 + $0x2b0] sm:$0xff]
    %v135 = vld [vmem:[%s1 + $0x2b8] sm:$0xff]
    %v136 = vld [vmem:[%s1 + $0x2c0] sm:$0xff]
    %v137 = vld [vmem:[%s1 + $0x2c8] sm:$0xff]
    %v138 = vld [vmem:[%s1 + $0x2d0] sm:$0xff]
    %v139 = vld [vmem:[%s1 + $0x2d8] sm:$0xff]
    %v140 = vld [vmem:[%s1 + $0x2e0] sm:$0xff]
    %v141 = vld [vmem:[%s1 + $0x2e8] sm:$0xff]
    %v142 = vld [vmem:[%s1 + $0x2f0] sm:$0xff]
    %v143 = vld [vmem:[%s1 + $0x2f8] sm:$0xff]
    %v144 = vld [vmem:[%s1 + $0x300] sm:$0xff]
    %v145 = vld [vmem:[%s1 + $0x308] sm:$0xff]
    %v146 = vld [vmem:[%s1 + $0x310] sm:$0xff]
    %v147 = vld [vmem:[%s1 + $0x318] sm:$0xff]
    %v148 = vld [vmem:[%s1 + $0x320] sm:$0xff]
    %v149 = vld [vmem:[%s1 + $0x328] sm:$0xff]
    %v150 = vld [vmem:[%s1 + $0x330] sm:$0xff]
    %v151 = vld [vmem:[%s1 + $0x338] sm:$0xff]
    %v152 = vld [vmem:[%s1 + $0x340] sm:$0xff]
    %v153 = vld [vmem:[%s1 + $0x348] sm:$0xff]
    %v154 = vld [vmem:[%s1 + $0x350] sm:$0xff]
    %v155 = vld [vmem:[%s1 + $0x358] sm:$0xff]
    %v156 = vld [vmem:[%s1 + $0x360] sm:$0xff]
    %v157 = vld [vmem:[%s1 + $0x368] sm:$0xff]
    %v158 = vld [vmem:[%s1 + $0x370] sm:$0xff]
    %v159 = vld [vmem:[%s1 + $0x378] sm:$0xff]
    %v160 = vld [vmem:[%s1 + $0x380] sm:$0xff]
    %v161 = vld [vmem:[%s1 + $0x388] sm:$0xff]
    %v162 = vld [vmem:[%s1 + $0x390] sm:$0xff]
    %v163 = vld [vmem:[%s1 + $0x398] sm:$0xff]
    %v164 = vld [vmem:[%s1 + $0x3a0] sm:$0xff]
    %v165 = vld [vmem:[%s1 + $0x3a8] sm:$0xff]
    %v166 = vld [vmem:[%s1 + $0x3b0] sm:$0xff]
    %v167 = vld [vmem:[%s1 + $0x3b8] sm:$0xff]
    %v168 = vld [vmem:[%s1 + $0x3c0] sm:$0xff]
    %v169 = vld [vmem:[%s1 + $0x3c8] sm:$0xff]
    %v170 = vld [vmem:[%s1 + $0x3d0] sm:$0xff]
    %v171 = vld [vmem:[%s1 + $0x3d8] sm:$0xff]
    %v172 = vld [vmem:[%s1 + $0x3e0] sm:$0xff]
    %v173 = vld [vmem:[%s1 + $0x3e8] sm:$0xff]
    %v174 = vld [vmem:[%s1 + $0x3f0] sm:$0xff]
    %v175 = vld [vmem:[%s1 + $0x3f8] sm:$0xff]
    %v176 = vld [vmem:[%s1 + $0x400] sm:$0xff]
    %v177 = vld [vmem:[%s1 + $0x408] sm:$0xff]
    %v178 = vld [vmem:[%s1 + $0x410] sm:$0xff]
    %v179 = vld [vmem:[%s1 + $0x418] sm:$0xff]
    %v180 = vld [vmem:[%s1 + $0x420] sm:$0xff]
    %v181 = vld [vmem:[%s1 + $0x428] sm:$0xff]
    %v182 = vld [vmem:[%s1 + $0x430] sm:$0xff]
    %v183 = vld [vmem:[%s1 + $0x438] sm:$0xff]
    %v184 = vld [vmem:[%s1 + $0x440] sm:$0xff]
    %v185 = vld [vmem:[%s1 + $0x448] sm:$0xff]
    %v186 = vld [vmem:[%s1 + $0x450] sm:$0xff]
    %v187 = vld [vmem:[%s1 + $0x458] sm:$0xff]
    %v188 = vld [vmem:[%s1 + $0x460] sm:$0xff]
    %v189 = vld [vmem:[%s1 + $0x468] sm:$0xff]
    %v190 = vld [vmem:[%s1 + $0x470] sm:$0xff]
    %v191 = vld [vmem:[%s1 + $0x478] sm:$0xff]
    %v192 = vld [vmem:[%s1 + $0x480] sm:$0xff]
    %v193 = vld [vmem:[%s1 + $0x488] sm:$0xff]
    %v194 = vld [vmem:[%s1 + $0x490] sm:$0xff]
    %v195 = vld [vmem:[%s1 + $0x498] sm:$0xff]
    %v196 = vld [vmem:[%s1 + $0x4a0] sm:$0xff]
    %v197 = vld [vmem:[%s1 + $0x4a8] sm:$0xff]
    %v198 = vld [vmem:[%s1 + $0x4b0] sm:$0xff]
    %v199 = vld [vmem:[%s1 + $0x4b8] sm:$0xff]
    %v200 = vld [vmem:[%s1 + $0x4c0] sm:$0xff]
    %v201 = vld [vmem:[%s1 + $0x4c8] sm:$0xff]
    %v202 = vld [vmem:[%s1 + $0x4d0] sm:$0xff]
    %v203 = vld [vmem:[%s1 + $0x4d8] sm:$0xff]
    %v204 = vld [vmem:[%s1 + $0x4e0] sm:$0xff]
    %v205 = vld [vmem:[%s1 + $0x4e8] sm:$0xff]
    %v206 = vld [vmem:[%s1 + $0x4f0] sm:$0xff]
    %v207 = vld [vmem:[%s1 + $0x4f8] sm:$0xff]
    %v208 = vld [vmem:[%s1 + $0x500] sm:$0xff]
    %v209 = vld [vmem:[%s1 + $0x508] sm:$0xff]
    %v210 = vld [vmem:[%s1 + $0x510] sm:$0xff]
    %v211 = vld [vmem:[%s1 + $0x518] sm:$0xff]
    %v212 = vld [vmem:[%s1 + $0x520] sm:$0xff]
    %v213 = vld [vmem:[%s1 + $0x528] sm:$0xff]
    %v214 = vld [vmem:[%s1 + $0x530] sm:$0xff]
    %v215 = vld [vmem:[%s1 + $0x538] sm:$0xff]
    %v216 = vld [vmem:[%s1 + $0x540] sm:$0xff]
    %v217 = vld [vmem:[%s1 + $0x548] sm:$0xff]
    %v218 = vld [vmem:[%s1 + $0x550] sm:$0xff]
    %v219 = vld [vmem:[%s1 + $0x558] sm:$0xff]
    %v220 = vld [vmem:[%s1 + $0x560] sm:$0xff]
    %v221 = vld [vmem:[%s1 + $0x568] sm:$0xff]
    %v222 = vld [vmem:[%s1 + $0x570] sm:$0xff]
    %v223 = vld [vmem:[%s1 + $0x578] sm:$0xff]
    %v224 = vld [vmem:[%s1 + $0x580] sm:$0xff]
    %v225 = vld [vmem:[%s1 + $0x588] sm:$0xff]
    %v226 = vld [vmem:[%s1 + $0x590] sm:$0xff]
    %v227 = vld [vmem:[%s1 + $0x598] sm:$0xff]
    %v228 = vld [vmem:[%s1 + $0x5a0] sm:$0xff]
    %v229 = vld [vmem:[%s1 + $0x5a8] sm:$0xff]
    %v230 = vld [vmem:[%s1 + $0x5b0] sm:$0xff]
    %v231 = vld [vmem:[%s1 + $0x5b8] sm:$0xff]
    %v232 = vld [vmem:[%s1 + $0x5c0] sm:$0xff]
    %v233 = vld [vmem:[%s1 + $0x5c8] sm:$0xff]
    %v234 = vld [vmem:[%s1 + $0x5d0] sm:$0xff]
    %v235 = vld [vmem:[%s1 + $0x5d8] sm:$0xff]
    %v236 = vld [vmem:[%s1 + $0x5e0] sm:$0xff]
    %v237 = vld [vmem:[%s1 + $0x5e8] sm:$0xff]
    %v238 = vld [vmem:[%s1 + $0x5f0] sm:$0xff]
    %v239 = vld [vmem:[%s1 + $0x5f8] sm:$0xff]
    %v240 = vld [vmem:[%s1 + $0x600] sm:$0xff]
    %v241 = vld [vmem:[%s1 + $0x608] sm:$0xff]
    %v242 = vld [vmem:[%s1 + $0x610] sm:$0xff]
    %v243 = vld [vmem:[%s1 + $0x618] sm:$0xff]
    %v244 = vld [vmem:[%s1 + $0x620] sm:$0xff]
    %v245 = vld [vmem:[%s1 + $0x628] sm:$0xff]
    %v246 = vld [vmem:[%s1 + $0x630] sm:$0xff]
    %v247 = vld [vmem:[%s1 + $0x638] sm:$0xff]
    %v248 = vld [vmem:[%s1 + $0x640] sm:$0xff]
    %v249 = vld [vmem:[%s1 + $0x648] sm:$0xff]
    %v250 = vld [vmem:[%s1 + $0x650] sm:$0xff]
    %v251 = vld [vmem:[%s1 + $0x658] sm:$0xff]
    %v252 = vld [vmem:[%s1 + $0x660] sm:$0xff]
    %v253 = vld [vmem:[%s1 + $0x668] sm:$0xff]
    %v254 = vld [vmem:[%s1 + $0x670] sm:$0xff]
    %v255 = vld [vmem:[%s1 + $0x678] sm:$0xff]
    %v256 = vld [vmem:[%s1 + $0x680] sm:$0xff]
    %v257 = vld [vmem:[%s1 + $0x688] sm:$0xff]
    %v258 = vld [vmem:[%s1 + $0x690] sm:$0xff]
    %v259 = vld [vmem:[%s1 + $0x698] sm:$0xff]
    %v260 = vld [vmem:[%s1 + $0x6a0] sm:$0xff]
    %v261 = vld [vmem:[%s1 + $0x6a8] sm:$0xff]
    %v262 = vld [vmem:[%s1 + $0x6b0] sm:$0xff]
    %v263 = vld [vmem:[%s1 + $0x6b8] sm:$0xff]
    %v264 = vld [vmem:[%s1 + $0x6c0] sm:$0xff]
    %v265 = vld [vmem:[%s1 + $0x6c8] sm:$0xff]
    %v266 = vld [vmem:[%s1 + $0x6d0] sm:$0xff]
    %v267 = vld [vmem:[%s1 + $0x6d8] sm:$0xff]
    %v268 = vld [vmem:[%s1 + $0x6e0] sm:$0xff]
    %v269 = vld [vmem:[%s1 + $0x6e8] sm:$0xff]
    %v270 = vld [vmem:[%s1 + $0x6f0] sm:$0xff]
    %v271 = vld [vmem:[%s1 + $0x6f8] sm:$0xff]
    %v272 = vld [vmem:[%s1 + $0x700] sm:$0xff]
    %v273 = vld [vmem:[%s1 + $0x708] sm:$0xff]
    %v274 = vld [vmem:[%s1 + $0x710] sm:$0xff]
    %v275 = vld [vmem:[%s1 + $0x718] sm:$0xff]
    %v276 = vld [vmem:[%s1 + $0x720] sm:$0xff]
    %v277 = vld [vmem:[%s1 + $0x728] sm:$0xff]
    %v278 = vld [vmem:[%s1 + $0x730] sm:$0xff]
    %v279 = vld [vmem:[%s1 + $0x738] sm:$0xff]
    %v280 = vld [vmem:[%s1 + $0x740] sm:$0xff]
    %v281 = vld [vmem:[%s1 + $0x748] sm:$0xff]
    %v282 = vld [vmem:[%s1 + $0x750] sm:$0xff]
    %v283 = vld [vmem:[%s1 + $0x758] sm:$0xff]
    %v284 = vld [vmem:[%s1 + $0x760] sm:$0xff]
    %v285 = vld [vmem:[%s1 + $0x768] sm:$0xff]
    %v286 = vld [vmem:[%s1 + $0x770] sm:$0xff]
    %v287 = vld [vmem:[%s1 + $0x778] sm:$0xff]
    %v288 = vld [vmem:[%s1 + $0x780] sm:$0xff]
    %v289 = vld [vmem:[%s1 + $0x788] sm:$0xff]
    %v290 = vld [vmem:[%s1 + $0x790] sm:$0xff]
    %v291 = vld [vmem:[%s1 + $0x798] sm:$0xff]
    %v292 = vld [vmem:[%s1 + $0x7a0] sm:$0xff]
    %v293 = vld [vmem:[%s1 + $0x7a8] sm:$0xff]
    %v294 = vld [vmem:[%s1 + $0x7b0] sm:$0xff]
    %v295 = vld [vmem:[%s1 + $0x7b8] sm:$0xff]
    %v296 = vld [vmem:[%s1 + $0x7c0] sm:$0xff]
    %v297 = vld [vmem:[%s1 + $0x7c8] sm:$0xff]
    %v298 = vld [vmem:[%s1 + $0x7d0] sm:$0xff]
    %v299 = vld [vmem:[%s1 + $0x7d8] sm:$0xff]
    %v300 = vld [vmem:[%s1 + $0x7e0] sm:$0xff]
    %v301 = vld [vmem:[%s1 + $0x7e8] sm:$0xff]
    %v302 = vld [vmem:[%s1 + $0x7f0] sm:$0xff]
    %v303 = vld [vmem:[%s1 + $0x7f8] sm:$0xff]
    %v304 = vld [vmem:[%s1 + $0x800] sm:$0xff]
    %v305 = vld [vmem:[%s1 + $0x808] sm:$0xff]
    %v306 = vld [vmem:[%s1 + $0x810] sm:$0xff]
    %v307 = vld [vmem:[%s1 + $0x818] sm:$0xff]
    %v308 = vld [vmem:[%s1 + $0x820] sm:$0xff]
    %v309 = vld [vmem:[%s1 + $0x828] sm:$0xff]
    %v310 = vld [vmem:[%s1 + $0x830] sm:$0xff]
    %v311 = vld [vmem:[%s1 + $0x838] sm:$0xff]
    %v312 = vld [vmem:[%s1 + $0x840] sm:$0xff]
    %v313 = vld [vmem:[%s1 + $0x848] sm:$0xff]
    %v314 = vld [vmem:[%s1 + $0x850] sm:$0xff]
    %v315 = vld [vmem:[%s1 + $0x858] sm:$0xff]
    %v316 = vld [vmem:[%s1 + $0x860] sm:$0xff]
    %v317 = vld [vmem:[%s1 + $0x868] sm:$0xff]
    %v318 = vld [vmem:[%s1 + $0x870] sm:$0xff]
    %v319 = vld [vmem:[%s1 + $0x878] sm:$0xff]
    %v320 = vld [vmem:[%s1 + $0x880] sm:$0xff]
    %v321 = vld [vmem:[%s1 + $0x888] sm:$0xff]
    %v322 = vld [vmem:[%s1 + $0x890] sm:$0xff]
    %v323 = vld [vmem:[%s1 + $0x898] sm:$0xff]
    %v324 = vld [vmem:[%s1 + $0x8a0] sm:$0xff]
    %v325 = vld [vmem:[%s1 + $0x8a8] sm:$0xff]
    %v326 = vld [vmem:[%s1 + $0x8b0] sm:$0xff]
    %v327 = vld [vmem:[%s1 + $0x8b8] sm:$0xff]
    %v328 = vld [vmem:[%s1 + $0x8c0] sm:$0xff]
    %v329 = vld [vmem:[%s1 + $0x8c8] sm:$0xff]
    %v330 = vld [vmem:[%s1 + $0x8d0] sm:$0xff]
    %v331 = vld [vmem:[%s1 + $0x8d8] sm:$0xff]
    %v332 = vld [vmem:[%s1 + $0x8e0] sm:$0xff]
    %v333 = vld [vmem:[%s1 + $0x8e8] sm:$0xff]
    %v334 = vld [vmem:[%s1 + $0x8f0] sm:$0xff]
    %v335 = vld [vmem:[%s1 + $0x8f8] sm:$0xff]
    %v336 = vld [vmem:[%s1 + $0x900] sm:$0xff]
    %v337 = vld [vmem:[%s1 + $0x908] sm:$0xff]
    %v338 = vld [vmem:[%s1 + $0x910] sm:$0xff]
    %v339 = vld [vmem:[%s1 + $0x918] sm:$0xff]
    %v340 = vld [vmem:[%s1 + $0x920] sm:$0xff]
    %v341 = vld [vmem:[%s1 + $0x928] sm:$0xff]
    %v342 = vld [vmem:[%s1 + $0x930] sm:$0xff]
    %v343 = vld [vmem:[%s1 + $0x938] sm:$0xff]
    %v344 = vld [vmem:[%s1 + $0x940] sm:$0xff]
    %v345 = vld [vmem:[%s1 + $0x948] sm:$0xff]
    %v346 = vld [vmem:[%s1 + $0x950] sm:$0xff]
    %v347 = vld [vmem:[%s1 + $0x958] sm:$0xff]
    %v348 = vld [vmem:[%s1 + $0x960] sm:$0xff]
    %v349 = vld [vmem:[%s1 + $0x968] sm:$0xff]
    %v350 = vld [vmem:[%s1 + $0x970] sm:$0xff]
    %v351 = vld [vmem:[%s1 + $0x978] sm:$0xff]
    %v352 = vld [vmem:[%s1 + $0x980] sm:$0xff]
    %v353 = vld [vmem:[%s1 + $0x988] sm:$0xff]
    %v354 = vld [vmem:[%s1 + $0x990] sm:$0xff]
    %v355 = vld [vmem:[%s1 + $0x998] sm:$0xff]
    %v356 = vld [vmem:[%s1 + $0x9a0] sm:$0xff]
    %v357 = vld [vmem:[%s1 + $0x9a8] sm:$0xff]
    %v358 = vld [vmem:[%s1 + $0x9b0] sm:$0xff]
    %v359 = vld [vmem:[%s1 + $0x9b8] sm:$0xff]
    %v360 = vld [vmem:[%s1 + $0x9c0] sm:$0xff]
    %v361 = vld [vmem:[%s1 + $0x9c8] sm:$0xff]
    %v362 = vld [vmem:[%s1 + $0x9d0] sm:$0xff]
    %v363 = vld [vmem:[%s1 + $0x9d8] sm:$0xff]
    %v364 = vld [vmem:[%s1 + $0x9e0] sm:$0xff]
    %v365 = vld [vmem:[%s1 + $0x9e8] sm:$0xff]
    %v366 = vld [vmem:[%s1 + $0x9f0] sm:$0xff]
    %v367 = vld [vmem:[%s1 + $0x9f8] sm:$0xff]
    %v368 = vld [vmem:[%s1 + $0xa00] sm:$0xff]
    %v369 = vld [vmem:[%s1 + $0xa08] sm:$0xff]
    %v370 = vld [vmem:[%s1 + $0xa10] sm:$0xff]
    %v371 = vld [vmem:[%s1 + $0xa18] sm:$0xff]
    %v372 = vld [vmem:[%s1 + $0xa20] sm:$0xff]
    %v373 = vld [vmem:[%s1 + $0xa28] sm:$0xff]
    %v374 = vld [vmem:[%s1 + $0xa30] sm:$0xff]
    %v375 = vld [vmem:[%s1 + $0xa38] sm:$0xff]
    %v376 = vld [vmem:[%s1 + $0xa40] sm:$0xff]
    %v377 = vld [vmem:[%s1 + $0xa48] sm:$0xff]
    %v378 = vld [vmem:[%s1 + $0xa50] sm:$0xff]
    %v379 = vld [vmem:[%s1 + $0xa58] sm:$0xff]
    %v380 = vld [vmem:[%s1 + $0xa60] sm:$0xff]
    %v381 = vld [vmem:[%s1 + $0xa68] sm:$0xff]
    %v382 = vld [vmem:[%s1 + $0xa70] sm:$0xff]
    %v383 = vld [vmem:[%s1 + $0xa78] sm:$0xff]
    %v384 = vld [vmem:[%s1 + $0xa80] sm:$0xff]
    %v385 = vld [vmem:[%s1 + $0xa88] sm:$0xff]
    %v386 = vld [vmem:[%s1 + $0xa90] sm:$0xff]
    %v387 = vld [vmem:[%s1 + $0xa98] sm:$0xff]
    %v388 = vld [vmem:[%s1 + $0xaa0] sm:$0xff]
    %v389 = vld [vmem:[%s1 + $0xaa8] sm:$0xff]
    %v390 = vld [vmem:[%s1 + $0xab0] sm:$0xff]
    %v391 = vld [vmem:[%s1 + $0xab8] sm:$0xff]
    %v392 = vld [vmem:[%s1 + $0xac0] sm:$0xff]
    %v393 = vld [vmem:[%s1 + $0xac8] sm:$0xff]
    %v394 = vld [vmem:[%s1 + $0xad0] sm:$0xff]
    %v395 = vld [vmem:[%s1 + $0xad8] sm:$0xff]
    %v396 = vld [vmem:[%s1 + $0xae0] sm:$0xff]
    %v397 = vld [vmem:[%s1 + $0xae8] sm:$0xff]
    %v398 = vld [vmem:[%s1 + $0xaf0] sm:$0xff]
    %v399 = vld [vmem:[%s1 + $0xaf8] sm:$0xff]
    %v400 = vld [vmem:[%s1 + $0xb00] sm:$0xff]
    %v401 = vld [vmem:[%s1 + $0xb08] sm:$0xff]
    %v402 = vld [vmem:[%s1 + $0xb10] sm:$0xff]
    %v403 = vld [vmem:[%s1 + $0xb18] sm:$0xff]
    %v404 = vld [vmem:[%s1 + $0xb20] sm:$0xff]
    %v405 = vld [vmem:[%s1 + $0xb28] sm:$0xff]
    %v406 = vld [vmem:[%s1 + $0xb30] sm:$0xff]
    %v407 = vld [vmem:[%s1 + $0xb38] sm:$0xff]
    %v408 = vld [vmem:[%s1 + $0xb40] sm:$0xff]
    %v409 = vld [vmem:[%s1 + $0xb48] sm:$0xff]
    %v410 = vld [vmem:[%s1 + $0xb50] sm:$0xff]
    %v411 = vld [vmem:[%s1 + $0xb58] sm:$0xff]
    %v412 = vld [vmem:[%s1 + $0xb60] sm:$0xff]
    %v413 = vld [vmem:[%s1 + $0xb68] sm:$0xff]
    %v414 = vld [vmem:[%s1 + $0xb70] sm:$0xff]
    %v415 = vld [vmem:[%s1 + $0xb78] sm:$0xff]
    %v416 = vld [vmem:[%s1 + $0xb80] sm:$0xff]
    %v417 = vld [vmem:[%s1 + $0xb88] sm:$0xff]
    %v418 = vld [vmem:[%s1 + $0xb90] sm:$0xff]
    %v419 = vld [vmem:[%s1 + $0xb98] sm:$0xff]
    %v420 = vld [vmem:[%s1 + $0xba0] sm:$0xff]
    %v421 = vld [vmem:[%s1 + $0xba8] sm:$0xff]
    %v422 = vld [vmem:[%s1 + $0xbb0] sm:$0xff]
    %v423 = vld [vmem:[%s1 + $0xbb8] sm:$0xff]
    %v424 = vld [vmem:[%s1 + $0xbc0] sm:$0xff]
    %v425 = vld [vmem:[%s1 + $0xbc8] sm:$0xff]
    %v426 = vld [vmem:[%s1 + $0xbd0] sm:$0xff]
    %v427 = vld [vmem:[%s1 + $0xbd8] sm:$0xff]
    %v428 = vld [vmem:[%s1 + $0xbe0] sm:$0xff]
    %v429 = vld [vmem:[%s1 + $0xbe8] sm:$0xff]
    %v430 = vld [vmem:[%s1 + $0xbf0] sm:$0xff]
    %v431 = vld [vmem:[%s1 + $0xbf8] sm:$0xff]
    %v432 = vld [vmem:[%s1 + $0xc00] sm:$0xff]
    %v433 = vld [vmem:[%s1 + $0xc08] sm:$0xff]
    %v434 = vld [vmem:[%s1 + $0xc10] sm:$0xff]
    %v435 = vld [vmem:[%s1 + $0xc18] sm:$0xff]
    %v436 = vld [vmem:[%s1 + $0xc20] sm:$0xff]
    %v437 = vld [vmem:[%s1 + $0xc28] sm:$0xff]
    %v438 = vld [vmem:[%s1 + $0xc30] sm:$0xff]
    %v439 = vld [vmem:[%s1 + $0xc38] sm:$0xff]
    %v440 = vld [vmem:[%s1 + $0xc40] sm:$0xff]
    %v441 = vld [vmem:[%s1 + $0xc48] sm:$0xff]
    %v442 = vld [vmem:[%s1 + $0xc50] sm:$0xff]
    %v443 = vld [vmem:[%s1 + $0xc58] sm:$0xff]
    %v444 = vld [vmem:[%s1 + $0xc60] sm:$0xff]
    %v445 = vld [vmem:[%s1 + $0xc68] sm:$0xff]
    %v446 = vld [vmem:[%s1 + $0xc70] sm:$0xff]
    %v447 = vld [vmem:[%s1 + $0xc78] sm:$0xff]
    %v448 = vld [vmem:[%s1 + $0xc80] sm:$0xff]
    %v449 = vld [vmem:[%s1 + $0xc88] sm:$0xff]
    %v450 = vld [vmem:[%s1 + $0xc90] sm:$0xff]
    %v451 = vld [vmem:[%s1 + $0xc98] sm:$0xff]
    %v452 = vld [vmem:[%s1 + $0xca0] sm:$0xff]
    %v453 = vld [vmem:[%s1 + $0xca8] sm:$0xff]
    %v454 = vld [vmem:[%s1 + $0xcb0] sm:$0xff]
    %v455 = vld [vmem:[%s1 + $0xcb8] sm:$0xff]
    %v456 = vld [vmem:[%s1 + $0xcc0] sm:$0xff]
    %v457 = vld [vmem:[%s1 + $0xcc8] sm:$0xff]
    %v458 = vld [vmem:[%s1 + $0xcd0] sm:$0xff]
    %v459 = vld [vmem:[%s1 + $0xcd8] sm:$0xff]
    %v460 = vld [vmem:[%s1 + $0xce0] sm:$0xff]
    %v461 = vld [vmem:[%s1 + $0xce8] sm:$0xff]
    %v462 = vld [vmem:[%s1 + $0xcf0] sm:$0xff]
    %v463 = vld [vmem:[%s1 + $0xcf8] sm:$0xff]
    %v464 = vld [vmem:[%s1 + $0xd00] sm:$0xff]
    %v465 = vld [vmem:[%s1 + $0xd08] sm:$0xff]
    %v466 = vld [vmem:[%s1 + $0xd10] sm:$0xff]
    %v467 = vld [vmem:[%s1 + $0xd18] sm:$0xff]
    %v468 = vld [vmem:[%s1 + $0xd20] sm:$0xff]
    %v469 = vld [vmem:[%s1 + $0xd28] sm:$0xff]
    %v470 = vld [vmem:[%s1 + $0xd30] sm:$0xff]
    %v471 = vld [vmem:[%s1 + $0xd38] sm:$0xff]
    %v472 = vld [vmem:[%s1 + $0xd40] sm:$0xff]
    %v473 = vld [vmem:[%s1 + $0xd48] sm:$0xff]
    %v474 = vld [vmem:[%s1 + $0xd50] sm:$0xff]
    %v475 = vld [vmem:[%s1 + $0xd58] sm:$0xff]
    %v476 = vld [vmem:[%s1 + $0xd60] sm:$0xff]
    %v477 = vld [vmem:[%s1 + $0xd68] sm:$0xff]
    %v478 = vld [vmem:[%s1 + $0xd70] sm:$0xff]
    %v479 = vld [vmem:[%s1 + $0xd78] sm:$0xff]
    %v480 = vld [vmem:[%s1 + $0xd80] sm:$0xff]
    %v481 = vld [vmem:[%s1 + $0xd88] sm:$0xff]
    %v482 = vld [vmem:[%s1 + $0xd90] sm:$0xff]
    %v483 = vld [vmem:[%s1 + $0xd98] sm:$0xff]
    %v484 = vld [vmem:[%s1 + $0xda0] sm:$0xff]
    %v485 = vld [vmem:[%s1 + $0xda8] sm:$0xff]
    %v486 = vld [vmem:[%s1 + $0xdb0] sm:$0xff]
    %v487 = vld [vmem:[%s1 + $0xdb8] sm:$0xff]
    %v488 = vld [vmem:[%s1 + $0xdc0] sm:$0xff]
    %v489 = vld [vmem:[%s1 + $0xdc8] sm:$0xff]
    %v490 = vld [vmem:[%s1 + $0xdd0] sm:$0xff]
    %v491 = vld [vmem:[%s1 + $0xdd8] sm:$0xff]
    %v492 = vld [vmem:[%s1 + $0xde0] sm:$0xff]
    %v493 = vld [vmem:[%s1 + $0xde8] sm:$0xff]
    %v494 = vld [vmem:[%s1 + $0xdf0] sm:$0xff]
    %v495 = vld [vmem:[%s1 + $0xdf8] sm:$0xff]
    %v496 = vld [vmem:[%s1 + $0xe00] sm:$0xff]
    %v497 = vld [vmem:[%s1 + $0xe08] sm:$0xff]
    %v498 = vld [vmem:[%s1 + $0xe10] sm:$0xff]
    %v499 = vld [vmem:[%s1 + $0xe18] sm:$0xff]
    %v500 = vld [vmem:[%s1 + $0xe20] sm:$0xff]
    %v501 = vld [vmem:[%s1 + $0xe28] sm:$0xff]
    %v502 = vld [vmem:[%s1 + $0xe30] sm:$0xff]
    %v503 = vld [vmem:[%s1 + $0xe38] sm:$0xff]
    %v504 = vld [vmem:[%s1 + $0xe40] sm:$0xff]
    %v505 = vld [vmem:[%s1 + $0xe48] sm:$0xff]
    %v506 = vld [vmem:[%s1 + $0xe50] sm:$0xff]
    %v507 = vld [vmem:[%s1 + $0xe58] sm:$0xff]
    %v508 = vld [vmem:[%s1 + $0xe60] sm:$0xff]
    %v509 = vld [vmem:[%s1 + $0xe68] sm:$0xff]
    %v510 = vld [vmem:[%s1 + $0xe70] sm:$0xff]
    %v511 = vld [vmem:[%s1 + $0xe78] sm:$0xff]
    %v512 = vld [vmem:[%s1 + $0xe80] sm:$0xff]
    %v513 = vld [vmem:[%s1 + $0xe88] sm:$0xff]
    %v514 = vld [vmem:[%s1 + $0xe90] sm:$0xff]
    %v515 = vld [vmem:[%s1 + $0xe98] sm:$0xff]
    %v516 = vld [vmem:[%s1 + $0xea0] sm:$0xff]
    %v517 = vld [vmem:[%s1 + $0xea8] sm:$0xff]
    %v518 = vld [vmem:[%s1 + $0xeb0] sm:$0xff]
    %v519 = vld [vmem:[%s1 + $0xeb8] sm:$0xff]
    %v520 = vld [vmem:[%s1 + $0xec0] sm:$0xff]
    %v521 = vld [vmem:[%s1 + $0xec8] sm:$0xff]
    %v522 = vld [vmem:[%s1 + $0xed0] sm:$0xff]
    %v523 = vld [vmem:[%s1 + $0xed8] sm:$0xff]
    %v524 = vld [vmem:[%s1 + $0xee0] sm:$0xff]
    %v525 = vld [vmem:[%s1 + $0xee8] sm:$0xff]
    %v526 = vld [vmem:[%s1 + $0xef0] sm:$0xff]
    %v527 = vld [vmem:[%s1 + $0xef8] sm:$0xff]
    %v528 = vld [vmem:[%s1 + $0xf00] sm:$0xff]
    %v529 = vld [vmem:[%s1 + $0xf08] sm:$0xff]
    %v530 = vld [vmem:[%s1 + $0xf10] sm:$0xff]
    %v531 = vld [vmem:[%s1 + $0xf18] sm:$0xff]
    %v532 = vld [vmem:[%s1 + $0xf20] sm:$0xff]
    %v533 = vld [vmem:[%s1 + $0xf28] sm:$0xff]
    %v534 = vld [vmem:[%s1 + $0xf30] sm:$0xff]
    %v535 = vld [vmem:[%s1 + $0xf38] sm:$0xff]
    %v536 = vld [vmem:[%s1 + $0xf40] sm:$0xff]
    %v537 = vld [vmem:[%s1 + $0xf48] sm:$0xff]
    %v538 = vld [vmem:[%s1 + $0xf50] sm:$0xff]
    %v539 = vld [vmem:[%s1 + $0xf58] sm:$0xff]
    %v540 = vld [vmem:[%s1 + $0xf60] sm:$0xff]
    %v541 = vld [vmem:[%s1 + $0xf68] sm:$0xff]
    %v542 = vld [vmem:[%s1 + $0xf70] sm:$0xff]
    %v543 = vld [vmem:[%s1 + $0xf78] sm:$0xff]
    %v544 = vld [vmem:[%s1 + $0xf80] sm:$0xff]
    %v545 = vld [vmem:[%s1 + $0xf88] sm:$0xff]
    %v546 = vld [vmem:[%s1 + $0xf90] sm:$0xff]
    %v547 = vld [vmem:[%s1 + $0xf98] sm:$0xff]
    %v548 = vld [vmem:[%s1 + $0xfa0] sm:$0xff]
    %v549 = vld [vmem:[%s1 + $0xfa8] sm:$0xff]
    %v550 = vld [vmem:[%s1 + $0xfb0] sm:$0xff]
    %v551 = vld [vmem:[%s1 + $0xfb8] sm:$0xff]
    %v552 = vld [vmem:[%s1 + $0xfc0] sm:$0xff]
    %v553 = vld [vmem:[%s1 + $0xfc8] sm:$0xff]
    %v554 = vld [vmem:[%s1 + $0xfd0] sm:$0xff]
    %v555 = vld [vmem:[%s1 + $0xfd8] sm:$0xff]
    %v556 = vld [vmem:[%s1 + $0xfe0] sm:$0xff]
    %v557 = vld [vmem:[%s1 + $0xfe8] sm:$0xff]
    %v558 = vld [vmem:[%s1 + $0xff0] sm:$0xff]
    %v559 = vld [vmem:[%s1 + $0xff8] sm:$0xff]
    %v560 = vld [vmem:[%s1 + $0x1000] sm:$0xff]
    %v561 = vld [vmem:[%s1 + $0x1008] sm:$0xff]
    %v562 = vld [vmem:[%s1 + $0x1010] sm:$0xff]
    %v563 = vld [vmem:[%s1 + $0x1018] sm:$0xff]
    %v564 = vld [vmem:[%s1 + $0x1020] sm:$0xff]
    %v565 = vld [vmem:[%s1 + $0x1028] sm:$0xff]
    %v566 = vld [vmem:[%s1 + $0x1030] sm:$0xff]
    %v567 = vld [vmem:[%s1 + $0x1038] sm:$0xff]
    %v568 = vld [vmem:[%s1 + $0x1040] sm:$0xff]
    %v569 = vld [vmem:[%s1 + $0x1048] sm:$0xff]
    %v570 = vld [vmem:[%s1 + $0x1050] sm:$0xff]
    %v571 = vld [vmem:[%s1 + $0x1058] sm:$0xff]
    %v572 = vld [vmem:[%s1 + $0x1060] sm:$0xff]
    %v573 = vld [vmem:[%s1 + $0x1068] sm:$0xff]
    %v574 = vld [vmem:[%s1 + $0x1070] sm:$0xff]
    %v575 = vld [vmem:[%s1 + $0x1078] sm:$0xff]
    %v576 = vld [vmem:[%s1 + $0x1080] sm:$0xff]
    %v577 = vld [vmem:[%s1 + $0x1088] sm:$0xff]
    %v578 = vld [vmem:[%s1 + $0x1090] sm:$0xff]
    %v579 = vld [vmem:[%s1 + $0x1098] sm:$0xff]
    %v580 = vld [vmem:[%s1 + $0x10a0] sm:$0xff]
    %v581 = vld [vmem:[%s1 + $0x10a8] sm:$0xff]
    %v582 = vld [vmem:[%s1 + $0x10b0] sm:$0xff]
    %v583 = vld [vmem:[%s1 + $0x10b8] sm:$0xff]
    %v584 = vld [vmem:[%s1 + $0x10c0] sm:$0xff]
    %v585 = vld [vmem:[%s1 + $0x10c8] sm:$0xff]
    %v586 = vld [vmem:[%s1 + $0x10d0] sm:$0xff]
    %v587 = vld [vmem:[%s1 + $0x10d8] sm:$0xff]
    %v588 = vld [vmem:[%s1 + $0x10e0] sm:$0xff]
    %v589 = vld [vmem:[%s1 + $0x10e8] sm:$0xff]
    %v590 = vld [vmem:[%s1 + $0x10f0] sm:$0xff]
    %v591 = vld [vmem:[%s1 + $0x10f8] sm:$0xff]
    %v592 = vld [vmem:[%s1 + $0x1100] sm:$0xff]
    %v593 = vld [vmem:[%s1 + $0x1108] sm:$0xff]
    %v594 = vld [vmem:[%s1 + $0x1110] sm:$0xff]
    %v595 = vld [vmem:[%s1 + $0x1118] sm:$0xff]
    %v596 = vld [vmem:[%s1 + $0x1120] sm:$0xff]
    %v597 = vld [vmem:[%s1 + $0x1128] sm:$0xff]
    %v598 = vld [vmem:[%s1 + $0x1130] sm:$0xff]
    %v599 = vld [vmem:[%s1 + $0x1138] sm:$0xff]
    %v600 = vld [vmem:[%s1 + $0x1140] sm:$0xff]
    %v601 = vld [vmem:[%s1 + $0x1148] sm:$0xff]
    %v602 = vld [vmem:[%s1 + $0x1150] sm:$0xff]
    %v603 = vld [vmem:[%s1 + $0x1158] sm:$0xff]
    %v604 = vld [vmem:[%s1 + $0x1160] sm:$0xff]
    %v605 = vld [vmem:[%s1 + $0x1168] sm:$0xff]
    %v606 = vld [vmem:[%s1 + $0x1170] sm:$0xff]
    %v607 = vld [vmem:[%s1 + $0x1178] sm:$0xff]
    %v608 = vld [vmem:[%s1 + $0x1180] sm:$0xff]
    %v609 = vld [vmem:[%s1 + $0x1188] sm:$0xff]
    %v610 = vld [vmem:[%s1 + $0x1190] sm:$0xff]
    %v611 = vld [vmem:[%s1 + $0x1198] sm:$0xff]
    %v612 = vld [vmem:[%s1 + $0x11a0] sm:$0xff]
    %v613 = vld [vmem:[%s1 + $0x11a8] sm:$0xff]
    %v614 = vld [vmem:[%s1 + $0x11b0] sm:$0xff]
    %v615 = vld [vmem:[%s1 + $0x11b8] sm:$0xff]
    %v616 = vld [vmem:[%s1 + $0x11c0] sm:$0xff]
    %v617 = vld [vmem:[%s1 + $0x11c8] sm:$0xff]
    %v618 = vld [vmem:[%s1 + $0x11d0] sm:$0xff]
    %v619 = vld [vmem:[%s1 + $0x11d8] sm:$0xff]
    %v620 = vld [vmem:[%s1 + $0x11e0] sm:$0xff]
    %v621 = vld [vmem:[%s1 + $0x11e8] sm:$0xff]
    %v622 = vld [vmem:[%s1 + $0x11f0] sm:$0xff]
    %v623 = vld [vmem:[%s1 + $0x11f8] sm:$0xff]
    %624 = vmatprep.subr.mxu0 %v79
    %625 = vmatpush1.msra.mxu0 %v78
    %626 = vmatprep.subr.mxu0 %v77
    %627 = vmatpush1.msra.mxu0 %v76
    %628 = vmatprep.subr.mxu0 %v75
    %629 = vmatpush1.msra.mxu0 %v74
    %630 = vmatprep.subr.mxu0 %v73
    %631 = vmatpush1.msra.mxu0 %v72
    %632 = vmatprep.subr.mxu0 %v71
    %633 = vmatpush1.msra.mxu0 %v70
    %634 = vmatprep.subr.mxu0 %v69
    %635 = vmatpush1.msra.mxu0 %v68
    %636 = vmatprep.subr.mxu0 %v67
    %637 = vmatpush1.msra.mxu0 %v66
    %638 = vmatprep.subr.mxu0 %v65
    %639 = vmatpush1.msra.mxu0 %v64
    %640 = vmatprep.subr.mxu0 %v63
    %641 = vmatpush1.msra.mxu0 %v62
    %642 = vmatprep.subr.mxu0 %v61
    %643 = vmatpush1.msra.mxu0 %v60
    %644 = vmatprep.subr.mxu0 %v59
    %645 = vmatpush1.msra.mxu0 %v58
    %646 = vmatprep.subr.mxu0 %v57
    %647 = vmatpush1.msra.mxu0 %v56
    %648 = vmatprep.subr.mxu0 %v55
    %649 = vmatpush1.msra.mxu0 %v54
    %650 = vmatprep.subr.mxu0 %v53
    %651 = vmatpush1.msra.mxu0 %v52
    %652 = vmatprep.subr.mxu0 %v51
    %653 = vmatpush1.msra.mxu0 %v50
    %654 = vmatprep.subr.mxu0 %v49
    %655 = vmatpush1.msra.mxu0 %v48
    %656 = vmatprep.subr.mxu0 %v111
    %657 = vmatpush2.msra.mxu0 %v110
    %658 = vmatprep.subr.mxu0 %v109
    %659 = vmatpush2.msra.mxu0 %v108
    %660 = vmatprep.subr.mxu0 %v107
    %661 = vmatpush2.msra.mxu0 %v106
    %662 = vmatprep.subr.mxu0 %v105
    %663 = vmatpush2.msra.mxu0 %v104
    %664 = vmatprep.subr.mxu0 %v103
    %665 = vmatpush2.msra.mxu0 %v102
    %666 = vmatprep.subr.mxu0 %v101
    %667 = vmatpush2.msra.mxu0 %v100
    %668 = vmatprep.subr.mxu0 %v99
    %669 = vmatpush2.msra.mxu0 %v98
    %670 = vmatprep.subr.mxu0 %v97
    %671 = vmatpush2.msra.mxu0 %v96
    %672 = vmatprep.subr.mxu0 %v95
    %673 = vmatpush2.msra.mxu0 %v94
    %674 = vmatprep.subr.mxu0 %v93
    %675 = vmatpush2.msra.mxu0 %v92
    %676 = vmatprep.subr.mxu0 %v91
    %677 = vmatpush2.msra.mxu0 %v90
    %678 = vmatprep.subr.mxu0 %v89
    %679 = vmatpush2.msra.mxu0 %v88
    %680 = vmatprep.subr.mxu0 %v87
    %681 = vmatpush2.msra.mxu0 %v86
    %682 = vmatprep.subr.mxu0 %v85
    %683 = vmatpush2.msra.mxu0 %v84
    %684 = vmatprep.subr.mxu0 %v83
    %685 = vmatpush2.msra.mxu0 %v82
    %686 = vmatprep.subr.mxu0 %v81
    %687 = vmatpush2.msra.mxu0 %v80
    %688 = vmatprep.mubr.f32.mxu0 %v31
    %689 = vmatmul.mubr.f32.gmra.mxu0 %v30
    %v690 = vpop.f32.mrf.mxu0
    %v691 = vadd.f32 0.0, %v690
    %v692 = vpop.f32.mrf.mxu0
    %v693 = vadd.f32 0.0, %v692
    %694 = vdwg.mxu0
    %695 = vmatprep.subr.mxu0 %v143
    %696 = vmatpush1.msra.mxu0 %v142
    %697 = vmatprep.subr.mxu0 %v141
    %698 = vmatpush1.msra.mxu0 %v140
    %699 = vmatprep.subr.mxu0 %v139
    %700 = vmatpush1.msra.mxu0 %v138
    %701 = vmatprep.subr.mxu0 %v137
    %702 = vmatpush1.msra.mxu0 %v136
    %703 = vmatprep.subr.mxu0 %v135
    %704 = vmatpush1.msra.mxu0 %v134
    %705 = vmatprep.subr.mxu0 %v133
    %706 = vmatpush1.msra.mxu0 %v132
    %707 = vmatprep.subr.mxu0 %v131
    %708 = vmatpush1.msra.mxu0 %v130
    %709 = vmatprep.subr.mxu0 %v129
    %710 = vmatpush1.msra.mxu0 %v128
    %711 = vmatprep.subr.mxu0 %v127
    %712 = vmatpush1.msra.mxu0 %v126
    %713 = vmatprep.subr.mxu0 %v125
    %714 = vmatpush1.msra.mxu0 %v124
    %715 = vmatprep.subr.mxu0 %v123
    %716 = vmatpush1.msra.mxu0 %v122
    %717 = vmatprep.subr.mxu0 %v121
    %718 = vmatpush1.msra.mxu0 %v120
    %719 = vmatprep.subr.mxu0 %v119
    %720 = vmatpush1.msra.mxu0 %v118
    %721 = vmatprep.subr.mxu0 %v117
    %722 = vmatpush1.msra.mxu0 %v116
    %723 = vmatprep.subr.mxu0 %v115
    %724 = vmatpush1.msra.mxu0 %v114
    %725 = vmatprep.subr.mxu0 %v113
    %726 = vmatpush1.msra.mxu0 %v112
    %727 = vmatprep.subr.mxu0 %v175
    %728 = vmatpush2.msra.mxu0 %v174
    %729 = vmatprep.subr.mxu0 %v173
    %730 = vmatpush2.msra.mxu0 %v172
    %731 = vmatprep.subr.mxu0 %v171
    %732 = vmatpush2.msra.mxu0 %v170
    %733 = vmatprep.subr.mxu0 %v169
    %734 = vmatpush2.msra.mxu0 %v168
    %735 = vmatprep.subr.mxu0 %v167
    %736 = vmatpush2.msra.mxu0 %v166
    %737 = vmatprep.subr.mxu0 %v165
    %738 = vmatpush2.msra.mxu0 %v164
    %739 = vmatprep.subr.mxu0 %v163
    %740 = vmatpush2.msra.mxu0 %v162
    %741 = vmatprep.subr.mxu0 %v161
    %742 = vmatpush2.msra.mxu0 %v160
    %743 = vmatprep.subr.mxu0 %v159
    %744 = vmatpush2.msra.mxu0 %v158
    %745 = vmatprep.subr.mxu0 %v157
    %746 = vmatpush2.msra.mxu0 %v156
    %747 = vmatprep.subr.mxu0 %v155
    %748 = vmatpush2.msra.mxu0 %v154
    %749 = vmatprep.subr.mxu0 %v153
    %750 = vmatpush2.msra.mxu0 %v152
    %751 = vmatprep.subr.mxu0 %v151
    %752 = vmatpush2.msra.mxu0 %v150
    %753 = vmatprep.subr.mxu0 %v149
    %754 = vmatpush2.msra.mxu0 %v148
    %755 = vmatprep.subr.mxu0 %v147
    %756 = vmatpush2.msra.mxu0 %v146
    %757 = vmatprep.subr.mxu0 %v145
    %758 = vmatpush2.msra.mxu0 %v144
    %759 = vmatprep.mubr.f32.mxu0 %v33
    %760 = vmatmul.mubr.f32.gmra.mxu0 %v32
    %v761 = vpop.f32.mrf.mxu0
    %v762 = vadd.f32 %v691, %v761
    %v763 = vpop.f32.mrf.mxu0
    %v764 = vadd.f32 %v693, %v763
    %765 = vdwg.mxu0
    %766 = vmatprep.subr.mxu0 %v207
    %767 = vmatpush1.msra.mxu0 %v206
    %768 = vmatprep.subr.mxu0 %v205
    %769 = vmatpush1.msra.mxu0 %v204
    %770 = vmatprep.subr.mxu0 %v203
    %771 = vmatpush1.msra.mxu0 %v202
    %772 = vmatprep.subr.mxu0 %v201
    %773 = vmatpush1.msra.mxu0 %v200
    %774 = vmatprep.subr.mxu0 %v199
    %775 = vmatpush1.msra.mxu0 %v198
    %776 = vmatprep.subr.mxu0 %v197
    %777 = vmatpush1.msra.mxu0 %v196
    %778 = vmatprep.subr.mxu0 %v195
    %779 = vmatpush1.msra.mxu0 %v194
    %780 = vmatprep.subr.mxu0 %v193
    %781 = vmatpush1.msra.mxu0 %v192
    %782 = vmatprep.subr.mxu0 %v191
    %783 = vmatpush1.msra.mxu0 %v190
    %784 = vmatprep.subr.mxu0 %v189
    %785 = vmatpush1.msra.mxu0 %v188
    %786 = vmatprep.subr.mxu0 %v187
    %787 = vmatpush1.msra.mxu0 %v186
    %788 = vmatprep.subr.mxu0 %v185
    %789 = vmatpush1.msra.mxu0 %v184
    %790 = vmatprep.subr.mxu0 %v183
    %791 = vmatpush1.msra.mxu0 %v182
    %792 = vmatprep.subr.mxu0 %v181
    %793 = vmatpush1.msra.mxu0 %v180
    %794 = vmatprep.subr.mxu0 %v179
    %795 = vmatpush1.msra.mxu0 %v178
    %796 = vmatprep.subr.mxu0 %v177
    %797 = vmatpush1.msra.mxu0 %v176
    %798 = vmatprep.subr.mxu0 %v239
    %799 = vmatpush2.msra.mxu0 %v238
    %800 = vmatprep.subr.mxu0 %v237
    %801 = vmatpush2.msra.mxu0 %v236
    %802 = vmatprep.subr.mxu0 %v235
    %803 = vmatpush2.msra.mxu0 %v234
    %804 = vmatprep.subr.mxu0 %v233
    %805 = vmatpush2.msra.mxu0 %v232
    %806 = vmatprep.subr.mxu0 %v231
    %807 = vmatpush2.msra.mxu0 %v230
    %808 = vmatprep.subr.mxu0 %v229
    %809 = vmatpush2.msra.mxu0 %v228
    %810 = vmatprep.subr.mxu0 %v227
    %811 = vmatpush2.msra.mxu0 %v226
    %812 = vmatprep.subr.mxu0 %v225
    %813 = vmatpush2.msra.mxu0 %v224
    %814 = vmatprep.subr.mxu0 %v223
    %815 = vmatpush2.msra.mxu0 %v222
    %816 = vmatprep.subr.mxu0 %v221
    %817 = vmatpush2.msra.mxu0 %v220
    %818 = vmatprep.subr.mxu0 %v219
    %819 = vmatpush2.msra.mxu0 %v218
    %820 = vmatprep.subr.mxu0 %v217
    %821 = vmatpush2.msra.mxu0 %v216
    %822 = vmatprep.subr.mxu0 %v215
    %823 = vmatpush2.msra.mxu0 %v214
    %824 = vmatprep.subr.mxu0 %v213
    %825 = vmatpush2.msra.mxu0 %v212
    %826 = vmatprep.subr.mxu0 %v211
    %827 = vmatpush2.msra.mxu0 %v210
    %828 = vmatprep.subr.mxu0 %v209
    %829 = vmatpush2.msra.mxu0 %v208
    %830 = vmatprep.mubr.f32.mxu0 %v35
    %831 = vmatmul.mubr.f32.gmra.mxu0 %v34
    %v832 = vpop.f32.mrf.mxu0
    %v833 = vadd.f32 %v762, %v832
    %v834 = vpop.f32.mrf.mxu0
    %v835 = vadd.f32 %v764, %v834
    %836 = vdwg.mxu0
    %837 = vmatprep.subr.mxu0 %v271
    %838 = vmatpush1.msra.mxu0 %v270
    %839 = vmatprep.subr.mxu0 %v269
    %840 = vmatpush1.msra.mxu0 %v268
    %841 = vmatprep.subr.mxu0 %v267
    %842 = vmatpush1.msra.mxu0 %v266
    %843 = vmatprep.subr.mxu0 %v265
    %844 = vmatpush1.msra.mxu0 %v264
    %845 = vmatprep.subr.mxu0 %v263
    %846 = vmatpush1.msra.mxu0 %v262
    %847 = vmatprep.subr.mxu0 %v261
    %848 = vmatpush1.msra.mxu0 %v260
    %849 = vmatprep.subr.mxu0 %v259
    %850 = vmatpush1.msra.mxu0 %v258
    %851 = vmatprep.subr.mxu0 %v257
    %852 = vmatpush1.msra.mxu0 %v256
    %853 = vmatprep.subr.mxu0 %v255
    %854 = vmatpush1.msra.mxu0 %v254
    %855 = vmatprep.subr.mxu0 %v253
    %856 = vmatpush1.msra.mxu0 %v252
    %857 = vmatprep.subr.mxu0 %v251
    %858 = vmatpush1.msra.mxu0 %v250
    %859 = vmatprep.subr.mxu0 %v249
    %860 = vmatpush1.msra.mxu0 %v248
    %861 = vmatprep.subr.mxu0 %v247
    %862 = vmatpush1.msra.mxu0 %v246
    %863 = vmatprep.subr.mxu0 %v245
    %864 = vmatpush1.msra.mxu0 %v244
    %865 = vmatprep.subr.mxu0 %v243
    %866 = vmatpush1.msra.mxu0 %v242
    %867 = vmatprep.subr.mxu0 %v241
    %868 = vmatpush1.msra.mxu0 %v240
    %869 = vmatprep.subr.mxu0 %v303
    %870 = vmatpush2.msra.mxu0 %v302
    %871 = vmatprep.subr.mxu0 %v301
    %872 = vmatpush2.msra.mxu0 %v300
    %873 = vmatprep.subr.mxu0 %v299
    %874 = vmatpush2.msra.mxu0 %v298
    %875 = vmatprep.subr.mxu0 %v297
    %876 = vmatpush2.msra.mxu0 %v296
    %877 = vmatprep.subr.mxu0 %v295
    %878 = vmatpush2.msra.mxu0 %v294
    %879 = vmatprep.subr.mxu0 %v293
    %880 = vmatpush2.msra.mxu0 %v292
    %881 = vmatprep.subr.mxu0 %v291
    %882 = vmatpush2.msra.mxu0 %v290
    %883 = vmatprep.subr.mxu0 %v289
    %884 = vmatpush2.msra.mxu0 %v288
    %885 = vmatprep.subr.mxu0 %v287
    %886 = vmatpush2.msra.mxu0 %v286
    %887 = vmatprep.subr.mxu0 %v285
    %888 = vmatpush2.msra.mxu0 %v284
    %889 = vmatprep.subr.mxu0 %v283
    %890 = vmatpush2.msra.mxu0 %v282
    %891 = vmatprep.subr.mxu0 %v281
    %892 = vmatpush2.msra.mxu0 %v280
    %893 = vmatprep.subr.mxu0 %v279
    %894 = vmatpush2.msra.mxu0 %v278
    %895 = vmatprep.subr.mxu0 %v277
    %896 = vmatpush2.msra.mxu0 %v276
    %897 = vmatprep.subr.mxu0 %v275
    %898 = vmatpush2.msra.mxu0 %v274
    %899 = vmatprep.subr.mxu0 %v273
    %900 = vmatpush2.msra.mxu0 %v272
    %901 = vmatprep.mubr.f32.mxu0 %v37
    %902 = vmatmul.mubr.f32.gmra.mxu0 %v36
    %v903 = vpop.f32.mrf.mxu0
    %v904 = vadd.f32 %v833, %v903
    %v905 = vpop.f32.mrf.mxu0
    %v906 = vadd.f32 %v835, %v905
    %907 = vdwg.mxu0
    %908 = vmatprep.subr.mxu0 %v335
    %909 = vmatpush1.msra.mxu0 %v334
    %910 = vmatprep.subr.mxu0 %v333
    %911 = vmatpush1.msra.mxu0 %v332
    %912 = vmatprep.subr.mxu0 %v331
    %913 = vmatpush1.msra.mxu0 %v330
    %914 = vmatprep.subr.mxu0 %v329
    %915 = vmatpush1.msra.mxu0 %v328
    %916 = vmatprep.subr.mxu0 %v327
    %917 = vmatpush1.msra.mxu0 %v326
    %918 = vmatprep.subr.mxu0 %v325
    %919 = vmatpush1.msra.mxu0 %v324
    %920 = vmatprep.subr.mxu0 %v323
    %921 = vmatpush1.msra.mxu0 %v322
    %922 = vmatprep.subr.mxu0 %v321
    %923 = vmatpush1.msra.mxu0 %v320
    %924 = vmatprep.subr.mxu0 %v319
    %925 = vmatpush1.msra.mxu0 %v318
    %926 = vmatprep.subr.mxu0 %v317
    %927 = vmatpush1.msra.mxu0 %v316
    %928 = vmatprep.subr.mxu0 %v315
    %929 = vmatpush1.msra.mxu0 %v314
    %930 = vmatprep.subr.mxu0 %v313
    %931 = vmatpush1.msra.mxu0 %v312
    %932 = vmatprep.subr.mxu0 %v311
    %933 = vmatpush1.msra.mxu0 %v310
    %934 = vmatprep.subr.mxu0 %v309
    %935 = vmatpush1.msra.mxu0 %v308
    %936 = vmatprep.subr.mxu0 %v307
    %937 = vmatpush1.msra.mxu0 %v306
    %938 = vmatprep.subr.mxu0 %v305
    %939 = vmatpush1.msra.mxu0 %v304
    %940 = vmatprep.subr.mxu0 %v367
    %941 = vmatpush2.msra.mxu0 %v366
    %942 = vmatprep.subr.mxu0 %v365
    %943 = vmatpush2.msra.mxu0 %v364
    %944 = vmatprep.subr.mxu0 %v363
    %945 = vmatpush2.msra.mxu0 %v362
    %946 = vmatprep.subr.mxu0 %v361
    %947 = vmatpush2.msra.mxu0 %v360
    %948 = vmatprep.subr.mxu0 %v359
    %949 = vmatpush2.msra.mxu0 %v358
    %950 = vmatprep.subr.mxu0 %v357
    %951 = vmatpush2.msra.mxu0 %v356
    %952 = vmatprep.subr.mxu0 %v355
    %953 = vmatpush2.msra.mxu0 %v354
    %954 = vmatprep.subr.mxu0 %v353
    %955 = vmatpush2.msra.mxu0 %v352
    %956 = vmatprep.subr.mxu0 %v351
    %957 = vmatpush2.msra.mxu0 %v350
    %958 = vmatprep.subr.mxu0 %v349
    %959 = vmatpush2.msra.mxu0 %v348
    %960 = vmatprep.subr.mxu0 %v347
    %961 = vmatpush2.msra.mxu0 %v346
    %962 = vmatprep.subr.mxu0 %v345
    %963 = vmatpush2.msra.mxu0 %v344
    %964 = vmatprep.subr.mxu0 %v343
    %965 = vmatpush2.msra.mxu0 %v342
    %966 = vmatprep.subr.mxu0 %v341
    %967 = vmatpush2.msra.mxu0 %v340
    %968 = vmatprep.subr.mxu0 %v339
    %969 = vmatpush2.msra.mxu0 %v338
    %970 = vmatprep.subr.mxu0 %v337
    %971 = vmatpush2.msra.mxu0 %v336
    %972 = vmatprep.mubr.f32.mxu0 %v39
    %973 = vmatmul.mubr.f32.gmra.mxu0 %v38
    %v974 = vpop.f32.mrf.mxu0
    %v975 = vadd.f32 %v904, %v974
    %v976 = vpop.f32.mrf.mxu0
    %v977 = vadd.f32 %v906, %v976
    %978 = vdwg.mxu0
    %979 = vmatprep.subr.mxu0 %v399
    %980 = vmatpush1.msra.mxu0 %v398
    %981 = vmatprep.subr.mxu0 %v397
    %982 = vmatpush1.msra.mxu0 %v396
    %983 = vmatprep.subr.mxu0 %v395
    %984 = vmatpush1.msra.mxu0 %v394
    %985 = vmatprep.subr.mxu0 %v393
    %986 = vmatpush1.msra.mxu0 %v392
    %987 = vmatprep.subr.mxu0 %v391
    %988 = vmatpush1.msra.mxu0 %v390
    %989 = vmatprep.subr.mxu0 %v389
    %990 = vmatpush1.msra.mxu0 %v388
    %991 = vmatprep.subr.mxu0 %v387
    %992 = vmatpush1.msra.mxu0 %v386
    %993 = vmatprep.subr.mxu0 %v385
    %994 = vmatpush1.msra.mxu0 %v384
    %995 = vmatprep.subr.mxu0 %v383
    %996 = vmatpush1.msra.mxu0 %v382
    %997 = vmatprep.subr.mxu0 %v381
    %998 = vmatpush1.msra.mxu0 %v380
    %999 = vmatprep.subr.mxu0 %v379
    %1000 = vmatpush1.msra.mxu0 %v378
    %1001 = vmatprep.subr.mxu0 %v377
    %1002 = vmatpush1.msra.mxu0 %v376
    %1003 = vmatprep.subr.mxu0 %v375
    %1004 = vmatpush1.msra.mxu0 %v374
    %1005 = vmatprep.subr.mxu0 %v373
    %1006 = vmatpush1.msra.mxu0 %v372
    %1007 = vmatprep.subr.mxu0 %v371
    %1008 = vmatpush1.msra.mxu0 %v370
    %1009 = vmatprep.subr.mxu0 %v369
    %1010 = vmatpush1.msra.mxu0 %v368
    %1011 = vmatprep.subr.mxu0 %v431
    %1012 = vmatpush2.msra.mxu0 %v430
    %1013 = vmatprep.subr.mxu0 %v429
    %1014 = vmatpush2.msra.mxu0 %v428
    %1015 = vmatprep.subr.mxu0 %v427
    %1016 = vmatpush2.msra.mxu0 %v426
    %1017 = vmatprep.subr.mxu0 %v425
    %1018 = vmatpush2.msra.mxu0 %v424
    %1019 = vmatprep.subr.mxu0 %v423
    %1020 = vmatpush2.msra.mxu0 %v422
    %1021 = vmatprep.subr.mxu0 %v421
    %1022 = vmatpush2.msra.mxu0 %v420
    %1023 = vmatprep.subr.mxu0 %v419
    %1024 = vmatpush2.msra.mxu0 %v418
    %1025 = vmatprep.subr.mxu0 %v417
    %1026 = vmatpush2.msra.mxu0 %v416
    %1027 = vmatprep.subr.mxu0 %v415
    %1028 = vmatpush2.msra.mxu0 %v414
    %1029 = vmatprep.subr.mxu0 %v413
    %1030 = vmatpush2.msra.mxu0 %v412
    %1031 = vmatprep.subr.mxu0 %v411
    %1032 = vmatpush2.msra.mxu0 %v410
    %1033 = vmatprep.subr.mxu0 %v409
    %1034 = vmatpush2.msra.mxu0 %v408
    %1035 = vmatprep.subr.mxu0 %v407
    %1036 = vmatpush2.msra.mxu0 %v406
    %1037 = vmatprep.subr.mxu0 %v405
    %1038 = vmatpush2.msra.mxu0 %v404
    %1039 = vmatprep.subr.mxu0 %v403
    %1040 = vmatpush2.msra.mxu0 %v402
    %1041 = vmatprep.subr.mxu0 %v401
    %1042 = vmatpush2.msra.mxu0 %v400
    %1043 = vmatprep.mubr.f32.mxu0 %v41
    %1044 = vmatmul.mubr.f32.gmra.mxu0 %v40
    %v1045 = vpop.f32.mrf.mxu0
    %v1046 = vadd.f32 %v975, %v1045
    %v1047 = vpop.f32.mrf.mxu0
    %v1048 = vadd.f32 %v977, %v1047
    %1049 = vdwg.mxu0
    %1050 = vmatprep.subr.mxu0 %v463
    %1051 = vmatpush1.msra.mxu0 %v462
    %1052 = vmatprep.subr.mxu0 %v461
    %1053 = vmatpush1.msra.mxu0 %v460
    %1054 = vmatprep.subr.mxu0 %v459
    %1055 = vmatpush1.msra.mxu0 %v458
    %1056 = vmatprep.subr.mxu0 %v457
    %1057 = vmatpush1.msra.mxu0 %v456
    %1058 = vmatprep.subr.mxu0 %v455
    %1059 = vmatpush1.msra.mxu0 %v454
    %1060 = vmatprep.subr.mxu0 %v453
    %1061 = vmatpush1.msra.mxu0 %v452
    %1062 = vmatprep.subr.mxu0 %v451
    %1063 = vmatpush1.msra.mxu0 %v450
    %1064 = vmatprep.subr.mxu0 %v449
    %1065 = vmatpush1.msra.mxu0 %v448
    %1066 = vmatprep.subr.mxu0 %v447
    %1067 = vmatpush1.msra.mxu0 %v446
    %1068 = vmatprep.subr.mxu0 %v445
    %1069 = vmatpush1.msra.mxu0 %v444
    %1070 = vmatprep.subr.mxu0 %v443
    %1071 = vmatpush1.msra.mxu0 %v442
    %1072 = vmatprep.subr.mxu0 %v441
    %1073 = vmatpush1.msra.mxu0 %v440
    %1074 = vmatprep.subr.mxu0 %v439
    %1075 = vmatpush1.msra.mxu0 %v438
    %1076 = vmatprep.subr.mxu0 %v437
    %1077 = vmatpush1.msra.mxu0 %v436
    %1078 = vmatprep.subr.mxu0 %v435
    %1079 = vmatpush1.msra.mxu0 %v434
    %1080 = vmatprep.subr.mxu0 %v433
    %1081 = vmatpush1.msra.mxu0 %v432
    %1082 = vmatprep.subr.mxu0 %v495
    %1083 = vmatpush2.msra.mxu0 %v494
    %1084 = vmatprep.subr.mxu0 %v493
    %1085 = vmatpush2.msra.mxu0 %v492
    %1086 = vmatprep.subr.mxu0 %v491
    %1087 = vmatpush2.msra.mxu0 %v490
    %1088 = vmatprep.subr.mxu0 %v489
    %1089 = vmatpush2.msra.mxu0 %v488
    %1090 = vmatprep.subr.mxu0 %v487
    %1091 = vmatpush2.msra.mxu0 %v486
    %1092 = vmatprep.subr.mxu0 %v485
    %1093 = vmatpush2.msra.mxu0 %v484
    %1094 = vmatprep.subr.mxu0 %v483
    %1095 = vmatpush2.msra.mxu0 %v482
    %1096 = vmatprep.subr.mxu0 %v481
    %1097 = vmatpush2.msra.mxu0 %v480
    %1098 = vmatprep.subr.mxu0 %v479
    %1099 = vmatpush2.msra.mxu0 %v478
    %1100 = vmatprep.subr.mxu0 %v477
    %1101 = vmatpush2.msra.mxu0 %v476
    %1102 = vmatprep.subr.mxu0 %v475
    %1103 = vmatpush2.msra.mxu0 %v474
    %1104 = vmatprep.subr.mxu0 %v473
    %1105 = vmatpush2.msra.mxu0 %v472
    %1106 = vmatprep.subr.mxu0 %v471
    %1107 = vmatpush2.msra.mxu0 %v470
    %1108 = vmatprep.subr.mxu0 %v469
    %1109 = vmatpush2.msra.mxu0 %v468
    %1110 = vmatprep.subr.mxu0 %v467
    %1111 = vmatpush2.msra.mxu0 %v466
    %1112 = vmatprep.subr.mxu0 %v465
    %1113 = vmatpush2.msra.mxu0 %v464
    %1114 = vmatprep.mubr.f32.mxu0 %v43
    %1115 = vmatmul.mubr.f32.gmra.mxu0 %v42
    %v1116 = vpop.f32.mrf.mxu0
    %v1117 = vadd.f32 %v1046, %v1116
    %v1118 = vpop.f32.mrf.mxu0
    %v1119 = vadd.f32 %v1048, %v1118
    %1120 = vdwg.mxu0
    %1121 = vmatprep.subr.mxu0 %v527
    %1122 = vmatpush1.msra.mxu0 %v526
    %1123 = vmatprep.subr.mxu0 %v525
    %1124 = vmatpush1.msra.mxu0 %v524
    %1125 = vmatprep.subr.mxu0 %v523
    %1126 = vmatpush1.msra.mxu0 %v522
    %1127 = vmatprep.subr.mxu0 %v521
    %1128 = vmatpush1.msra.mxu0 %v520
    %1129 = vmatprep.subr.mxu0 %v519
    %1130 = vmatpush1.msra.mxu0 %v518
    %1131 = vmatprep.subr.mxu0 %v517
    %1132 = vmatpush1.msra.mxu0 %v516
    %1133 = vmatprep.subr.mxu0 %v515
    %1134 = vmatpush1.msra.mxu0 %v514
    %1135 = vmatprep.subr.mxu0 %v513
    %1136 = vmatpush1.msra.mxu0 %v512
    %1137 = vmatprep.subr.mxu0 %v511
    %1138 = vmatpush1.msra.mxu0 %v510
    %1139 = vmatprep.subr.mxu0 %v509
    %1140 = vmatpush1.msra.mxu0 %v508
    %1141 = vmatprep.subr.mxu0 %v507
    %1142 = vmatpush1.msra.mxu0 %v506
    %1143 = vmatprep.subr.mxu0 %v505
    %1144 = vmatpush1.msra.mxu0 %v504
    %1145 = vmatprep.subr.mxu0 %v503
    %1146 = vmatpush1.msra.mxu0 %v502
    %1147 = vmatprep.subr.mxu0 %v501
    %1148 = vmatpush1.msra.mxu0 %v500
    %1149 = vmatprep.subr.mxu0 %v499
    %1150 = vmatpush1.msra.mxu0 %v498
    %1151 = vmatprep.subr.mxu0 %v497
    %1152 = vmatpush1.msra.mxu0 %v496
    %1153 = vmatprep.subr.mxu0 %v559
    %1154 = vmatpush2.msra.mxu0 %v558
    %1155 = vmatprep.subr.mxu0 %v557
    %1156 = vmatpush2.msra.mxu0 %v556
    %1157 = vmatprep.subr.mxu0 %v555
    %1158 = vmatpush2.msra.mxu0 %v554
    %1159 = vmatprep.subr.mxu0 %v553
    %1160 = vmatpush2.msra.mxu0 %v552
    %1161 = vmatprep.subr.mxu0 %v551
    %1162 = vmatpush2.msra.mxu0 %v550
    %1163 = vmatprep.subr.mxu0 %v549
    %1164 = vmatpush2.msra.mxu0 %v548
    %1165 = vmatprep.subr.mxu0 %v547
    %1166 = vmatpush2.msra.mxu0 %v546
    %1167 = vmatprep.subr.mxu0 %v545
    %1168 = vmatpush2.msra.mxu0 %v544
    %1169 = vmatprep.subr.mxu0 %v543
    %1170 = vmatpush2.msra.mxu0 %v542
    %1171 = vmatprep.subr.mxu0 %v541
    %1172 = vmatpush2.msra.mxu0 %v540
    %1173 = vmatprep.subr.mxu0 %v539
    %1174 = vmatpush2.msra.mxu0 %v538
    %1175 = vmatprep.subr.mxu0 %v537
    %1176 = vmatpush2.msra.mxu0 %v536
    %1177 = vmatprep.subr.mxu0 %v535
    %1178 = vmatpush2.msra.mxu0 %v534
    %1179 = vmatprep.subr.mxu0 %v533
    %1180 = vmatpush2.msra.mxu0 %v532
    %1181 = vmatprep.subr.mxu0 %v531
    %1182 = vmatpush2.msra.mxu0 %v530
    %1183 = vmatprep.subr.mxu0 %v529
    %1184 = vmatpush2.msra.mxu0 %v528
    %1185 = vmatprep.mubr.f32.mxu0 %v45
    %1186 = vmatmul.mubr.f32.gmra.mxu0 %v44
    %v1187 = vpop.f32.mrf.mxu0
    %v1188 = vadd.f32 %v1117, %v1187
    %v1189 = vpop.f32.mrf.mxu0
    %v1190 = vadd.f32 %v1119, %v1189
    %1191 = vdwg.mxu0
    %1192 = vmatprep.subr.mxu0 %v591
    %1193 = vmatpush1.msra.mxu0 %v590
    %1194 = vmatprep.subr.mxu0 %v589
    %1195 = vmatpush1.msra.mxu0 %v588
    %1196 = vmatprep.subr.mxu0 %v587
    %1197 = vmatpush1.msra.mxu0 %v586
    %1198 = vmatprep.subr.mxu0 %v585
    %1199 = vmatpush1.msra.mxu0 %v584
    %1200 = vmatprep.subr.mxu0 %v583
    %1201 = vmatpush1.msra.mxu0 %v582
    %1202 = vmatprep.subr.mxu0 %v581
    %1203 = vmatpush1.msra.mxu0 %v580
    %1204 = vmatprep.subr.mxu0 %v579
    %1205 = vmatpush1.msra.mxu0 %v578
    %1206 = vmatprep.subr.mxu0 %v577
    %1207 = vmatpush1.msra.mxu0 %v576
    %1208 = vmatprep.subr.mxu0 %v575
    %1209 = vmatpush1.msra.mxu0 %v574
    %1210 = vmatprep.subr.mxu0 %v573
    %1211 = vmatpush1.msra.mxu0 %v572
    %1212 = vmatprep.subr.mxu0 %v571
    %1213 = vmatpush1.msra.mxu0 %v570
    %1214 = vmatprep.subr.mxu0 %v569
    %1215 = vmatpush1.msra.mxu0 %v568
    %1216 = vmatprep.subr.mxu0 %v567
    %1217 = vmatpush1.msra.mxu0 %v566
    %1218 = vmatprep.subr.mxu0 %v565
    %1219 = vmatpush1.msra.mxu0 %v564
    %1220 = vmatprep.subr.mxu0 %v563
    %1221 = vmatpush1.msra.mxu0 %v562
    %1222 = vmatprep.subr.mxu0 %v561
    %1223 = vmatpush1.msra.mxu0 %v560
    %1224 = vmatprep.subr.mxu0 %v623
    %1225 = vmatpush2.msra.mxu0 %v622
    %1226 = vmatprep.subr.mxu0 %v621
    %1227 = vmatpush2.msra.mxu0 %v620
    %1228 = vmatprep.subr.mxu0 %v619
    %1229 = vmatpush2.msra.mxu0 %v618
    %1230 = vmatprep.subr.mxu0 %v617
    %1231 = vmatpush2.msra.mxu0 %v616
    %1232 = vmatprep.subr.mxu0 %v615
    %1233 = vmatpush2.msra.mxu0 %v614
    %1234 = vmatprep.subr.mxu0 %v613
    %1235 = vmatpush2.msra.mxu0 %v612
    %1236 = vmatprep.subr.mxu0 %v611
    %1237 = vmatpush2.msra.mxu0 %v610
    %1238 = vmatprep.subr.mxu0 %v609
    %1239 = vmatpush2.msra.mxu0 %v608
    %1240 = vmatprep.subr.mxu0 %v607
    %1241 = vmatpush2.msra.mxu0 %v606
    %1242 = vmatprep.subr.mxu0 %v605
    %1243 = vmatpush2.msra.mxu0 %v604
    %1244 = vmatprep.subr.mxu0 %v603
    %1245 = vmatpush2.msra.mxu0 %v602
    %1246 = vmatprep.subr.mxu0 %v601
    %1247 = vmatpush2.msra.mxu0 %v600
    %1248 = vmatprep.subr.mxu0 %v599
    %1249 = vmatpush2.msra.mxu0 %v598
    %1250 = vmatprep.subr.mxu0 %v597
    %1251 = vmatpush2.msra.mxu0 %v596
    %1252 = vmatprep.subr.mxu0 %v595
    %1253 = vmatpush2.msra.mxu0 %v594
    %1254 = vmatprep.subr.mxu0 %v593
    %1255 = vmatpush2.msra.mxu0 %v592
    %1256 = vmatprep.mubr.f32.mxu0 %v47
    %1257 = vmatmul.mubr.f32.gmra.mxu0 %v46
    %v1258 = vpop.f32.mrf.mxu0
    %v1259 = vadd.f32 %v1188, %v1258
    %v1260 = vpop.f32.mrf.mxu0
    %v1261 = vadd.f32 %v1190, %v1260
    %1262 = vdwg.mxu0
    %vm1263 = vcmask 130048
    %v1264 = vsel %vm1263, %v1261, 0.0
    %v1265 = vadd.f32 %v1259, %v1264
    %1266 = vadd.xlane.f32.xlu0 %v1265
    %v1267 = vpop.xlane.xlu0 %1266
    %v1268 = vrcp.pop 144.0
    %v1269 = vmul.f32 %v1267, %v1268
    %v1270 = vmul.f32 %v1259, %v1259
    %v1271 = vmul.f32 %v1261, %v1261
    %v1272 = vsel %vm1263, %v1271, 0.0
    %v1273 = vadd.f32 %v1270, %v1272
    %1274 = vadd.xlane.f32.xlu0 %v1273
    %v1275 = vpop.xlane.xlu0 %1274
    %v1276 = vmul.f32 %v1275, %v1268
    %v1277 = vsub.f32 %v1259, %v1269
    %v1278 = vsub.f32 %v1261, %v1269
    %v1279 = vmul.f32 %v1269, %v1269
    %v1280 = vsub.f32 %v1276, %v1279
    %v1281 = vadd.f32 %v1280, 1e-05
    %v1282 = vrsqrt.pop %v1281
    %v1283 = vmul.f32 %v1277, %v1282
    %v1284 = vmul.f32 %v1278, %v1282
    %v1285 = vld [vmem:[%s2] sm:$0xff]
    %v1286 = vld [vmem:[%s2 + $0x8] sm:$0xff]
    %v1287 = vld [vmem:[%s2 + $0x10] sm:$0xff]
    %v1288 = vld [vmem:[%s2 + $0x18] sm:$0xff]
    %v1289 = vld [vmem:[%s2 + $0x20] sm:$0xff]
    %v1290 = vld [vmem:[%s2 + $0x28] sm:$0xff]
    %v1291 = vld [vmem:[%s2 + $0x30] sm:$0xff]
    %v1292 = vld [vmem:[%s2 + $0x38] sm:$0xff]
    %v1293 = vld [vmem:[%s2 + $0x40] sm:$0xff]
    %v1294 = vld [vmem:[%s2 + $0x48] sm:$0xff]
    %v1295 = vld [vmem:[%s2 + $0x50] sm:$0xff]
    %v1296 = vld [vmem:[%s2 + $0x58] sm:$0xff]
    %v1297 = vld [vmem:[%s2 + $0x60] sm:$0xff]
    %v1298 = vld [vmem:[%s2 + $0x68] sm:$0xff]
    %v1299 = vld [vmem:[%s2 + $0x70] sm:$0xff]
    %v1300 = vld [vmem:[%s2 + $0x78] sm:$0xff]
    %v1301 = vld [vmem:[%s2 + $0x80] sm:$0xff]
    %v1302 = vld [vmem:[%s2 + $0x88] sm:$0xff]
    %v1303 = vld [vmem:[%s3] sm:$0x1]
    %v1305 = vlaneseq
    %v1306 = vshrl.u32 %v1305, 7
    %v1307 = vsub.s32 0, %v1306
    %v1308 = vrot.slane %v1303, %v1307
    %v1311 = vsel %vm1263, %v1284, 0
    %1313 = vmatprep.subr.mxu0 0.0
    %1314 = vmatpush1.msra.mxu0 %v1300
    %1315 = vmatprep.subr.mxu0 0.0
    %1316 = vmatpush1.msra.mxu0 %v1299
    %1317 = vmatprep.subr.mxu0 0.0
    %1318 = vmatpush1.msra.mxu0 %v1298
    %1319 = vmatprep.subr.mxu0 0.0
    %1320 = vmatpush1.msra.mxu0 %v1297
    %1321 = vmatprep.subr.mxu0 0.0
    %1322 = vmatpush1.msra.mxu0 %v1296
    %1323 = vmatprep.subr.mxu0 0.0
    %1324 = vmatpush1.msra.mxu0 %v1295
    %1325 = vmatprep.subr.mxu0 0.0
    %1326 = vmatpush1.msra.mxu0 %v1294
    %1327 = vmatprep.subr.mxu0 0.0
    %1328 = vmatpush1.msra.mxu0 %v1293
    %1329 = vmatprep.subr.mxu0 0.0
    %1330 = vmatpush1.msra.mxu0 %v1292
    %1331 = vmatprep.subr.mxu0 0.0
    %1332 = vmatpush1.msra.mxu0 %v1291
    %1333 = vmatprep.subr.mxu0 0.0
    %1334 = vmatpush1.msra.mxu0 %v1290
    %1335 = vmatprep.subr.mxu0 0.0
    %1336 = vmatpush1.msra.mxu0 %v1289
    %1337 = vmatprep.subr.mxu0 0.0
    %1338 = vmatpush1.msra.mxu0 %v1288
    %1339 = vmatprep.subr.mxu0 0.0
    %1340 = vmatpush1.msra.mxu0 %v1287
    %1341 = vmatprep.subr.mxu0 0.0
    %1342 = vmatpush1.msra.mxu0 %v1286
    %1343 = vmatprep.subr.mxu0 0.0
    %1344 = vmatpush1.msra.mxu0 %v1285
    %1345 = vmatprep.subr.mxu0 0.0
    %1346 = vmatpush2.msra.mxu0 0.0
    %1347 = vmatprep.subr.mxu0 0.0
    %1348 = vmatpush2.msra.mxu0 0.0
    %1349 = vmatprep.subr.mxu0 0.0
    %1350 = vmatpush2.msra.mxu0 0.0
    %1351 = vmatprep.subr.mxu0 0.0
    %1352 = vmatpush2.msra.mxu0 0.0
    %1353 = vmatprep.subr.mxu0 0.0
    %1354 = vmatpush2.msra.mxu0 0.0
    %1355 = vmatprep.subr.mxu0 0.0
    %1356 = vmatpush2.msra.mxu0 0.0
    %1357 = vmatprep.subr.mxu0 0.0
    %1358 = vmatpush2.msra.mxu0 0.0
    %1359 = vmatprep.subr.mxu0 0.0
    %1360 = vmatpush2.msra.mxu0 0.0
    %1361 = vmatprep.subr.mxu0 0.0
    %1362 = vmatpush2.msra.mxu0 0.0
    %1363 = vmatprep.subr.mxu0 0.0
    %1364 = vmatpush2.msra.mxu0 0.0
    %1365 = vmatprep.subr.mxu0 0.0
    %1366 = vmatpush2.msra.mxu0 0.0
    %1367 = vmatprep.subr.mxu0 0.0
    %1368 = vmatpush2.msra.mxu0 0.0
    %1369 = vmatprep.subr.mxu0 0.0
    %1370 = vmatpush2.msra.mxu0 0.0
    %1371 = vmatprep.subr.mxu0 0.0
    %1372 = vmatpush2.msra.mxu0 0.0
    %1373 = vmatprep.subr.mxu0 0.0
    %1374 = vmatpush2.msra.mxu0 %v1302
    %1375 = vmatprep.subr.mxu0 0.0
    %1376 = vmatpush2.msra.mxu0 %v1301
    %1377 = vmatprep.mubr.f32.mxu0 %v1311
    %1378 = vmatmul.mubr.f32.gmra.mxu0 %v1283
    %v1379 = vpop.f32.mrf.mxu0
    %v1380 = vadd.f32 %v1308, %v1379
    %v1381 = vpop.f32.mrf.mxu0
    %1382 = vdwg.mxu0
    %v1383 = vmax.f32 %v1380, 0.0
    %v1384 = vld [vmem:[%s4] sm:$0xff]
    %v1385 = vld [vmem:[%s4 + $0x8] sm:$0xff]
    %v1386 = vld [vmem:[%s4 + $0x10] sm:$0xff]
    %v1387 = vld [vmem:[%s4 + $0x18] sm:$0xff]
    %v1388 = vld [vmem:[%s4 + $0x20] sm:$0xff]
    %v1389 = vld [vmem:[%s4 + $0x28] sm:$0xff]
    %v1390 = vld [vmem:[%s4 + $0x30] sm:$0xff]
    %v1391 = vld [vmem:[%s4 + $0x38] sm:$0xff]
    %v1392 = vld [vmem:[%s4 + $0x40] sm:$0xff]
    %v1393 = vld [vmem:[%s4 + $0x48] sm:$0xff]
    %v1394 = vld [vmem:[%s4 + $0x50] sm:$0xff]
    %v1395 = vld [vmem:[%s4 + $0x58] sm:$0xff]
    %v1396 = vld [vmem:[%s4 + $0x60] sm:$0xff]
    %v1397 = vld [vmem:[%s4 + $0x68] sm:$0xff]
    %v1398 = vld [vmem:[%s4 + $0x70] sm:$0xff]
    %v1399 = vld [vmem:[%s4 + $0x78] sm:$0xff]
    %v1400 = vld [vmem:[%s5] sm:$0x1]
    %v1402 = vlaneseq
    %v1403 = vshrl.u32 %v1402, 7
    %v1404 = vsub.s32 0, %v1403
    %v1405 = vrot.slane %v1400, %v1404
    %1407 = vmatprep.subr.mxu0 0.0
    %1408 = vmatpush1.msra.mxu0 %v1399
    %1409 = vmatprep.subr.mxu0 0.0
    %1410 = vmatpush1.msra.mxu0 %v1398
    %1411 = vmatprep.subr.mxu0 0.0
    %1412 = vmatpush1.msra.mxu0 %v1397
    %1413 = vmatprep.subr.mxu0 0.0
    %1414 = vmatpush1.msra.mxu0 %v1396
    %1415 = vmatprep.subr.mxu0 0.0
    %1416 = vmatpush1.msra.mxu0 %v1395
    %1417 = vmatprep.subr.mxu0 0.0
    %1418 = vmatpush1.msra.mxu0 %v1394
    %1419 = vmatprep.subr.mxu0 0.0
    %1420 = vmatpush1.msra.mxu0 %v1393
    %1421 = vmatprep.subr.mxu0 0.0
    %1422 = vmatpush1.msra.mxu0 %v1392
    %1423 = vmatprep.subr.mxu0 0.0
    %1424 = vmatpush1.msra.mxu0 %v1391
    %1425 = vmatprep.subr.mxu0 0.0
    %1426 = vmatpush1.msra.mxu0 %v1390
    %1427 = vmatprep.subr.mxu0 0.0
    %1428 = vmatpush1.msra.mxu0 %v1389
    %1429 = vmatprep.subr.mxu0 0.0
    %1430 = vmatpush1.msra.mxu0 %v1388
    %1431 = vmatprep.subr.mxu0 0.0
    %1432 = vmatpush1.msra.mxu0 %v1387
    %1433 = vmatprep.subr.mxu0 0.0
    %1434 = vmatpush1.msra.mxu0 %v1386
    %1435 = vmatprep.subr.mxu0 0.0
    %1436 = vmatpush1.msra.mxu0 %v1385
    %1437 = vmatprep.subr.mxu0 0.0
    %1438 = vmatpush1.msra.mxu0 %v1384
    %1439 = vmatprep.subr.mxu0 0.0
    %1440 = vmatpush2.msra.mxu0 0.0
    %1441 = vmatprep.subr.mxu0 0.0
    %1442 = vmatpush2.msra.mxu0 0.0
    %1443 = vmatprep.subr.mxu0 0.0
    %1444 = vmatpush2.msra.mxu0 0.0
    %1445 = vmatprep.subr.mxu0 0.0
    %1446 = vmatpush2.msra.mxu0 0.0
    %1447 = vmatprep.subr.mxu0 0.0
    %1448 = vmatpush2.msra.mxu0 0.0
    %1449 = vmatprep.subr.mxu0 0.0
    %1450 = vmatpush2.msra.mxu0 0.0
    %1451 = vmatprep.subr.mxu0 0.0
    %1452 = vmatpush2.msra.mxu0 0.0
    %1453 = vmatprep.subr.mxu0 0.0
    %1454 = vmatpush2.msra.mxu0 0.0
    %1455 = vmatprep.subr.mxu0 0.0
    %1456 = vmatpush2.msra.mxu0 0.0
    %1457 = vmatprep.subr.mxu0 0.0
    %1458 = vmatpush2.msra.mxu0 0.0
    %1459 = vmatprep.subr.mxu0 0.0
    %1460 = vmatpush2.msra.mxu0 0.0
    %1461 = vmatprep.subr.mxu0 0.0
    %1462 = vmatpush2.msra.mxu0 0.0
    %1463 = vmatprep.subr.mxu0 0.0
    %1464 = vmatpush2.msra.mxu0 0.0
    %1465 = vmatprep.subr.mxu0 0.0
    %1466 = vmatpush2.msra.mxu0 0.0
    %1467 = vmatprep.subr.mxu0 0.0
    %1468 = vmatpush2.msra.mxu0 0.0
    %1469 = vmatprep.subr.mxu0 0.0
    %1470 = vmatpush2.msra.mxu0 0.0
    %1471 = vmatprep.mubr.f32.mxu0 0.0
    %1472 = vmatmul.mubr.f32.gmra.mxu0 %v1383
    %v1473 = vpop.f32.mrf.mxu0
    %v1474 = vadd.f32 %v1405, %v1473
    %v1475 = vpop.f32.mrf.mxu0
    %1476 = vdwg.mxu0
    %v1477 = vmax.f32 %v1474, 0.0
    %v1478 = vld [vmem:[%s6] sm:$0xff]
    %v1479 = vld [vmem:[%s6 + $0x8] sm:$0xff]
    %v1480 = vld [vmem:[%s6 + $0x10] sm:$0xff]
    %v1481 = vld [vmem:[%s6 + $0x18] sm:$0xff]
    %v1482 = vld [vmem:[%s6 + $0x20] sm:$0xff]
    %v1483 = vld [vmem:[%s6 + $0x28] sm:$0xff]
    %v1484 = vld [vmem:[%s6 + $0x30] sm:$0xff]
    %v1485 = vld [vmem:[%s6 + $0x38] sm:$0xff]
    %v1486 = vld [vmem:[%s6 + $0x40] sm:$0xff]
    %v1487 = vld [vmem:[%s6 + $0x48] sm:$0xff]
    %v1488 = vld [vmem:[%s6 + $0x50] sm:$0xff]
    %v1489 = vld [vmem:[%s6 + $0x58] sm:$0xff]
    %v1490 = vld [vmem:[%s6 + $0x60] sm:$0xff]
    %v1491 = vld [vmem:[%s6 + $0x68] sm:$0xff]
    %v1492 = vld [vmem:[%s6 + $0x70] sm:$0xff]
    %v1493 = vld [vmem:[%s6 + $0x78] sm:$0xff]
    %v1494 = vld [vmem:[%s7] sm:$0x1]
    %v1496 = vlaneseq
    %v1497 = vshrl.u32 %v1496, 7
    %v1498 = vsub.s32 0, %v1497
    %v1499 = vrot.slane %v1494, %v1498
    %1501 = vmatprep.subr.mxu0 0.0
    %1502 = vmatpush1.msra.mxu0 %v1493
    %1503 = vmatprep.subr.mxu0 0.0
    %1504 = vmatpush1.msra.mxu0 %v1492
    %1505 = vmatprep.subr.mxu0 0.0
    %1506 = vmatpush1.msra.mxu0 %v1491
    %1507 = vmatprep.subr.mxu0 0.0
    %1508 = vmatpush1.msra.mxu0 %v1490
    %1509 = vmatprep.subr.mxu0 0.0
    %1510 = vmatpush1.msra.mxu0 %v1489
    %1511 = vmatprep.subr.mxu0 0.0
    %1512 = vmatpush1.msra.mxu0 %v1488
    %1513 = vmatprep.subr.mxu0 0.0
    %1514 = vmatpush1.msra.mxu0 %v1487
    %1515 = vmatprep.subr.mxu0 0.0
    %1516 = vmatpush1.msra.mxu0 %v1486
    %1517 = vmatprep.subr.mxu0 0.0
    %1518 = vmatpush1.msra.mxu0 %v1485
    %1519 = vmatprep.subr.mxu0 0.0
    %1520 = vmatpush1.msra.mxu0 %v1484
    %1521 = vmatprep.subr.mxu0 0.0
    %1522 = vmatpush1.msra.mxu0 %v1483
    %1523 = vmatprep.subr.mxu0 0.0
    %1524 = vmatpush1.msra.mxu0 %v1482
    %1525 = vmatprep.subr.mxu0 0.0
    %1526 = vmatpush1.msra.mxu0 %v1481
    %1527 = vmatprep.subr.mxu0 0.0
    %1528 = vmatpush1.msra.mxu0 %v1480
    %1529 = vmatprep.subr.mxu0 0.0
    %1530 = vmatpush1.msra.mxu0 %v1479
    %1531 = vmatprep.subr.mxu0 0.0
    %1532 = vmatpush1.msra.mxu0 %v1478
    %1533 = vmatprep.subr.mxu0 0.0
    %1534 = vmatpush2.msra.mxu0 0.0
    %1535 = vmatprep.subr.mxu0 0.0
    %1536 = vmatpush2.msra.mxu0 0.0
    %1537 = vmatprep.subr.mxu0 0.0
    %1538 = vmatpush2.msra.mxu0 0.0
    %1539 = vmatprep.subr.mxu0 0.0
    %1540 = vmatpush2.msra.mxu0 0.0
    %1541 = vmatprep.subr.mxu0 0.0
    %1542 = vmatpush2.msra.mxu0 0.0
    %1543 = vmatprep.subr.mxu0 0.0
    %1544 = vmatpush2.msra.mxu0 0.0
    %1545 = vmatprep.subr.mxu0 0.0
    %1546 = vmatpush2.msra.mxu0 0.0
    %1547 = vmatprep.subr.mxu0 0.0
    %1548 = vmatpush2.msra.mxu0 0.0
    %1549 = vmatprep.subr.mxu0 0.0
    %1550 = vmatpush2.msra.mxu0 0.0
    %1551 = vmatprep.subr.mxu0 0.0
    %1552 = vmatpush2.msra.mxu0 0.0
    %1553 = vmatprep.subr.mxu0 0.0
    %1554 = vmatpush2.msra.mxu0 0.0
    %1555 = vmatprep.subr.mxu0 0.0
    %1556 = vmatpush2.msra.mxu0 0.0
    %1557 = vmatprep.subr.mxu0 0.0
    %1558 = vmatpush2.msra.mxu0 0.0
    %1559 = vmatprep.subr.mxu0 0.0
    %1560 = vmatpush2.msra.mxu0 0.0
    %1561 = vmatprep.subr.mxu0 0.0
    %1562 = vmatpush2.msra.mxu0 0.0
    %1563 = vmatprep.subr.mxu0 0.0
    %1564 = vmatpush2.msra.mxu0 0.0
    %1565 = vmatprep.mubr.f32.mxu0 0.0
    %1566 = vmatmul.mubr.f32.gmra.mxu0 %v1477
    %v1567 = vpop.f32.mrf.mxu0
    %v1568 = vadd.f32 %v1499, %v1567
    %v1569 = vpop.f32.mrf.mxu0
    %1570 = vdwg.mxu0
    %1571 = vst [vmem:[#allocation2] sm:$0xff] %v1568
    // Predicated region
    $region34: #{tpu_custom_call.1} parent=1 // pred_check
      _
    $region35: #{tpu_custom_call.1} parent=1 // pred_check_branch
      %1573 = sbr.rel (0) target = $region37
    $region36: #{tpu_custom_call.1} parent=1 // pred_region
      %s1575 = ssub.s32 128, 128
      %1576 = vsyncadd [#allocation3], %s1575
      %s1578 = sshll.u32 [#allocation2], 4
      %s1579 = int_to_ptr.vmem [resolvable:$true] %s1578
      %1581 = dma.vmem_to_hbm [thread:$0]  %s1579, 128, %s8, [#allocation3]
    $region37: #{tpu_custom_call.1} parent=1 // pred_fallthru
      _
    // Predicated region
    $region38: #{tpu_custom_call.1} parent=1 // pred_check
      _
    $region39: #{tpu_custom_call.1} parent=1 // pred_check_branch
      %1583 = sbr.rel (0) target = $region41
    $region40: #{tpu_custom_call.1} parent=1 // pred_region
      %1584 = dma.done [#allocation3], 128
    $region41: #{tpu_custom_call.1} parent=1 // pred_fallthru
      _
    %1585 = vsyncpa [#allocation3], 1

</llo_original>
